<compile_context>
chip_gen: v7x
topology: tpu7x:2x2x1
jax: 0.10.0
libtpu: 0.0.40
codegen_flags: <defaults>
</compile_context>

<pallas_src>
import functools

import jax
import jax.numpy as jnp
from jax.experimental import pallas as pl
from jax.experimental.pallas import tpu as pltpu


# ----------------------------------------------------------------------------
# Per-generation knobs.
# ----------------------------------------------------------------------------
def _device_kind():
    try:
        return jax.devices()[0].device_kind.lower()
    except Exception:
        return ""


_KIND = _device_kind()
# bf16 EUP exists on v6e/v7x; older chips compute transcendentals in f32.
_SILU_BF16 = ("v5" not in _KIND) and ("v4" not in _KIND) and ("v3" not in _KIND)
if "v7" in _KIND:
    _VMEM_LIMIT = 48 * 1024 * 1024          # 64 MiB physical -> leave headroom
elif ("v5" in _KIND) or ("v6" in _KIND):
    _VMEM_LIMIT = 96 * 1024 * 1024          # 128 MiB physical
else:
    _VMEM_LIMIT = 48 * 1024 * 1024          # conservative default, safe anywhere


def _round_up(x, m):
    return (x + m - 1) // m * m


def _pick_tile(total, target, mult):
    """Largest multiple of `mult` that divides `total` and is <= target."""
    t = min(target, total)
    t -= t % mult
    while t >= mult:
        if total % t == 0:
            return t
        t -= mult
    return total


def _silu(v, bf16_sigmoid):
    if bf16_sigmoid:
        sig = jax.nn.sigmoid(v.astype(jnp.bfloat16)).astype(v.dtype)
    else:
        sig = jax.nn.sigmoid(v)
    return v * sig


# ----------------------------------------------------------------------------
# Fused encoder kernel: stem conv (as matmul) -> SiLU -> 1x1 head -> SiLU -> GAP
# Grid = (Np // tile_n, S // tile_s); batch axis "parallel", spatial axis
# "arbitrary" (reduction).  GAP accumulates into a f32 VMEM scratch; the bf16
# output block is written once at the last spatial step.
# ----------------------------------------------------------------------------
def _encoder_kernel(p_ref, sw_ref, sb_ref, hw_ref, hb_ref, h_ref, acc_ref, *,
                    inv_s, silu_bf16):
    s = pl.program_id(1)

    @pl.when(s == 0)
    def _():
        acc_ref[...] = jnp.zeros_like(acc_ref)

    tn, ts, k9 = p_ref.shape
    cp = acc_ref.shape[-1]

    x = p_ref[...].reshape(tn * ts, k9)                       # (tn*ts, K9) bf16
    # stem 3x3 conv tap-matmul (bf16 MXU, f32 accumulate) + bias + SiLU
    y = jnp.dot(x, sw_ref[...], preferred_element_type=jnp.float32) + sb_ref[...]
    y = _silu(y, silu_bf16)
    # head 1x1 conv (bf16 MXU, f32 accumulate) + bias + SiLU
    z = jnp.dot(y.astype(jnp.bfloat16), hw_ref[...],
                preferred_element_type=jnp.float32) + hb_ref[...]
    z = _silu(z, silu_bf16)
    # partial global-average-pool contribution of this spatial tile
    acc_ref[...] += jnp.sum(z.reshape(tn, ts, cp), axis=1)

    @pl.when(s == pl.num_programs(1) - 1)
    def _():
        h_ref[...] = (acc_ref[...] * inv_s).astype(h_ref.dtype)


def encoder_forward(patches, stem_w, stem_b, head_w, head_b, *,
                    tile_n=8, tile_s=1024):
    """patches: (Np, S, K9) bf16 -> pooled features (Np, Cp) bf16."""
    Np, S, K9 = patches.shape
    Cs = stem_w.shape[1]
    Cp = head_w.shape[1]
    assert Np % tile_n == 0
    tile_s = _pick_tile(S, tile_s, 16)      # bf16 prefers 16-row sublane packing
    grid = (Np // tile_n, S // tile_s)

    cost = pl.CostEstimate(
        flops=2 * Np * S * (K9 * Cs + Cs * Cp),
        transcendentals=Np * S * (Cs + Cp),
        bytes_accessed=(Np * S * K9 * 2 + (K9 * Cs + Cs * Cp) * 2
                        + (Cs + Cp) * 4 + Np * Cp * 2))

    return pl.pallas_call(
        functools.partial(_encoder_kernel, inv_s=1.0 / S, silu_bf16=_SILU_BF16),
        out_shape=jax.ShapeDtypeStruct((Np, Cp), jnp.bfloat16),
        grid=grid,
        in_specs=[
            pl.BlockSpec((tile_n, tile_s, K9), lambda n, s: (n, s, 0)),
            pl.BlockSpec((K9, Cs), lambda n, s: (0, 0)),
            pl.BlockSpec((1, Cs), lambda n, s: (0, 0)),
            pl.BlockSpec((Cs, Cp), lambda n, s: (0, 0)),
            pl.BlockSpec((1, Cp), lambda n, s: (0, 0)),
        ],
        out_specs=pl.BlockSpec((tile_n, Cp), lambda n, s: (n, 0)),
        scratch_shapes=[pltpu.VMEM((tile_n, Cp), jnp.float32)],
        compiler_params=pltpu.CompilerParams(
            dimension_semantics=("parallel", "arbitrary"),
            vmem_limit_bytes=_VMEM_LIMIT),
        cost_estimate=cost,
    )(patches, stem_w, stem_b, head_w, head_b)


# ----------------------------------------------------------------------------
# Fused projector kernel: Linear(Cp, 512) -> ReLU -> Linear(512, proj_dim)
# Intermediate (tile_n, 512) activation stays in VMEM / vregs.
# ----------------------------------------------------------------------------
def _projector_kernel(h_ref, w1_ref, b1_ref, w2_ref, b2_ref, z_ref):
    a = jnp.dot(h_ref[...], w1_ref[...],
                preferred_element_type=jnp.float32) + b1_ref[...]
    a = jnp.maximum(a, 0.0)
    z_ref[...] = jnp.dot(a.astype(jnp.bfloat16), w2_ref[...],
                         preferred_element_type=jnp.float32) + b2_ref[...]


def projector_forward(h, w1, b1, w2, b2, *, tile_n=256):
    Np, Cp = h.shape
    Hd = w1.shape[1]
    P = w2.shape[1]
    tile_n = _pick_tile(Np, tile_n, 8)      # Np is already a multiple of 8
    grid = (Np // tile_n,)

    cost = pl.CostEstimate(
        flops=2 * Np * (Cp * Hd + Hd * P),
        transcendentals=0,
        bytes_accessed=(Np * Cp * 2 + (Cp * Hd + Hd * P) * 2
                        + (Hd + P) * 4 + Np * P * 4))

    return pl.pallas_call(
        _projector_kernel,
        out_shape=jax.ShapeDtypeStruct((Np, P), jnp.float32),
        grid=grid,
        in_specs=[
            pl.BlockSpec((tile_n, Cp), lambda i: (i, 0)),
            pl.BlockSpec((Cp, Hd), lambda i: (0, 0)),
            pl.BlockSpec((1, Hd), lambda i: (0, 0)),
            pl.BlockSpec((Hd, P), lambda i: (0, 0)),
            pl.BlockSpec((1, P), lambda i: (0, 0)),
        ],
        out_specs=pl.BlockSpec((tile_n, P), lambda i: (i, 0)),
        compiler_params=pltpu.CompilerParams(
            dimension_semantics=("parallel",),
            vmem_limit_bytes=_VMEM_LIMIT),
        cost_estimate=cost,
    )(h, w1, b1, w2, b2)


# ----------------------------------------------------------------------------
# Glue: im2col for the strided 3x3 stem conv (layout plumbing in JAX).
# ----------------------------------------------------------------------------
def im2col(x_nhwc, ksize=3, stride=2, pad=1):
    N, H, W, C = x_nhwc.shape
    xp = jnp.pad(x_nhwc, ((0, 0), (pad, pad), (pad, pad), (0, 0)))
    Ho = (H + 2 * pad - ksize) // stride + 1
    Wo = (W + 2 * pad - ksize) // stride + 1
    cols = []
    for di in range(ksize):
        for dj in range(ksize):
            cols.append(xp[:, di:di + stride * Ho:stride,
                           dj:dj + stride * Wo:stride, :])
    patches = jnp.concatenate(cols, axis=-1)                # (N, Ho, Wo, k*k*C)
    return patches.reshape(N, Ho * Wo, ksize * ksize * C), (N, Ho, Wo)


# ----------------------------------------------------------------------------
# Deterministic synthetic parameters (no checkpoint load); feature channels are
# padded 64 -> 128 for lane density; padded fc1 rows are zero so math matches.
# ----------------------------------------------------------------------------
def make_params(key, cin=3, stem_c=32, num_features=64, feat_pad=128,
                hidden=512, projection_dim=128):
    ks = jax.random.split(key, 8)
    p = {}
    p["stem_w"] = jax.random.normal(ks[0], (3 * 3 * cin, stem_c), jnp.float32) * 0.1
    p["stem_b"] = jax.random.normal(ks[1], (stem_c,), jnp.float32) * 0.01
    head_w = jax.random.normal(ks[2], (stem_c, num_features), jnp.float32) * 0.1
    head_b = jax.random.normal(ks[3], (num_features,), jnp.float32) * 0.01
    p["head_w"] = jnp.pad(head_w, ((0, 0), (0, feat_pad - num_features)))
    p["head_b"] = jnp.pad(head_b, (0, feat_pad - num_features))
    fc1_w = jax.random.normal(ks[4], (num_features, hidden), jnp.float32) * 0.05
    p["fc1_w"] = jnp.pad(fc1_w, ((0, feat_pad - num_features), (0, 0)))
    p["fc1_b"] = jax.random.normal(ks[5], (hidden,), jnp.float32) * 0.01
    p["fc2_w"] = jax.random.normal(ks[6], (hidden, projection_dim), jnp.float32) * 0.05
    p["fc2_b"] = jax.random.normal(ks[7], (projection_dim,), jnp.float32) * 0.01
    return p


# ----------------------------------------------------------------------------
# SimCLR forward: encoder (fused stem + head + GAP) -> projector (fused MLP).
# ----------------------------------------------------------------------------
def simclr_forward(params, x_nchw, *, tile_n=8, tile_s=1024):
    x = jnp.transpose(x_nchw, (0, 2, 3, 1)).astype(jnp.float32)   # NCHW -> NHWC
    patches, _ = im2col(x, ksize=3, stride=2, pad=1)              # (N, S, 9*Cin)
    patches = patches.astype(jnp.bfloat16)

    N = patches.shape[0]
    Np = _round_up(N, tile_n)
    if Np != N:
        patches = jnp.pad(patches, ((0, Np - N), (0, 0), (0, 0)))

    h = encoder_forward(
        patches,
        params["stem_w"].astype(jnp.bfloat16),
        params["stem_b"].reshape(1, -1),
        params["head_w"].astype(jnp.bfloat16),
        params["head_b"].reshape(1, -1),
        tile_n=tile_n, tile_s=tile_s)                             # (Np, 128) bf16

    z = projector_forward(
        h,
        params["fc1_w"].astype(jnp.bfloat16),
        params["fc1_b"].reshape(1, -1),
        params["fc2_w"].astype(jnp.bfloat16),
        params["fc2_b"].reshape(1, -1))                           # (Np, proj_dim)
    return z[:N]


# Pure-JAX reference with the same bf16-operand / f32-accumulate math.
def simclr_reference(params, x_nchw):
    x = jnp.transpose(x_nchw, (0, 2, 3, 1)).astype(jnp.float32)
    patches, _ = im2col(x, ksize=3, stride=2, pad=1)
    p = patches.astype(jnp.bfloat16)
    y = jnp.einsum("nsk,kc->nsc", p, params["stem_w"].astype(jnp.bfloat16),
                   preferred_element_type=jnp.float32) + params["stem_b"]
    y = _silu(y, _SILU_BF16)
    z = jnp.einsum("nsc,cf->nsf", y.astype(jnp.bfloat16),
                   params["head_w"].astype(jnp.bfloat16),
                   preferred_element_type=jnp.float32) + params["head_b"]
    z = _silu(z, _SILU_BF16)
    h = jnp.mean(z, axis=1).astype(jnp.bfloat16)
    a = jnp.dot(h, params["fc1_w"].astype(jnp.bfloat16),
                preferred_element_type=jnp.float32) + params["fc1_b"]
    a = jnp.maximum(a, 0.0)
    return jnp.dot(a.astype(jnp.bfloat16), params["fc2_w"].astype(jnp.bfloat16),
                   preferred_element_type=jnp.float32) + params["fc2_b"]


if __name__ == "__main__":
    key = jax.random.PRNGKey(0)
    k_param, k_x = jax.random.split(key)

    params = make_params(k_param, cin=3, stem_c=32, num_features=64,
                         feat_pad=128, hidden=512, projection_dim=128)

    # small NCHW image input consistent with the module
    x = jax.random.normal(k_x, (2, 3, 16, 16), jnp.float32)

    z = simclr_forward(params, x)
    z = jax.block_until_ready(z)
    assert z.shape == (2, 128) and z.dtype == jnp.float32

    z_ref = jax.block_until_ready(simclr_reference(params, x))
    assert jnp.allclose(z, z_ref, atol=1e-2, rtol=1e-2), "mismatch vs reference"

    print("KERNEL_OK")
</pallas_src>

<mosaic_0001>
module attributes {stable_mosaic.version = 11 : i64} {
  func.func @_encoder_kernel(%arg0: i32, %arg1: i32, %arg2: memref<8x64x27xbf16, #tpu.memory_space<vmem>>, %arg3: memref<27x32xbf16, #tpu.memory_space<vmem>>, %arg4: memref<1x32xf32, #tpu.memory_space<vmem>>, %arg5: memref<32x128xbf16, #tpu.memory_space<vmem>>, %arg6: memref<1x128xf32, #tpu.memory_space<vmem>>, %arg7: memref<8x128xbf16, #tpu.memory_space<vmem>>, %arg8: memref<8x128xf32, #tpu.memory_space<vmem>>) attributes {dimension_semantics = [#tpu.dimension_semantics<parallel>, #tpu.dimension_semantics<arbitrary>], iteration_bounds = array<i64: 1, 1>, scalar_prefetch = 0 : i64, scratch_operands = 1 : i64, tpu.core_type = #tpu.core_type<tc>, window_params = [{transform_indices = @transform_0, window_bounds = array<i64: 8, 64, 27>}, {pipeline_mode = #tpu.pipeline_mode<synchronous>, transform_indices = @transform_1, window_bounds = array<i64: 27, 32>}, {pipeline_mode = #tpu.pipeline_mode<synchronous>, transform_indices = @transform_2, window_bounds = array<i64: 1, 32>}, {pipeline_mode = #tpu.pipeline_mode<synchronous>, transform_indices = @transform_3, window_bounds = array<i64: 32, 128>}, {pipeline_mode = #tpu.pipeline_mode<synchronous>, transform_indices = @transform_4, window_bounds = array<i64: 1, 128>}, {transform_indices = @transform_5, window_bounds = array<i64: 8, 128>}]} {
    %c0_i32 = arith.constant 0 : i32
    %0 = arith.cmpi eq, %arg1, %c0_i32 : i32
    %1 = arith.extui %0 : i1 to i32
    %c0_i32_0 = arith.constant 0 : i32
    %2 = arith.cmpi ne, %1, %c0_i32_0 : i32
    scf.if %2 {
      %cst_21 = arith.constant 0.000000e+00 : f32
      %40 = vector.broadcast %cst_21 : f32 to vector<8x128xf32>
      %c0_22 = arith.constant 0 : index
      %c0_23 = arith.constant 0 : index
      %41 = vector.load %arg8[%c0_22, %c0_23] : memref<8x128xf32, #tpu.memory_space<vmem>>, vector<8x128xf32>
      tpu.vector_store %arg8[%c0_22, %c0_23], %40 {strides = array<i32>} : memref<8x128xf32, #tpu.memory_space<vmem>>, vector<8x128xf32>,
    } else {
    }
    %c0 = arith.constant 0 : index
    %c0_1 = arith.constant 0 : index
    %c0_2 = arith.constant 0 : index
    %3 = vector.load %arg2[%c0, %c0_1, %c0_2] : memref<8x64x27xbf16, #tpu.memory_space<vmem>>, vector<8x64x27xbf16>
    %4 = vector.shape_cast %3 : vector<8x64x27xbf16> to vector<512x27xbf16>
    %c0_3 = arith.constant 0 : index
    %c0_4 = arith.constant 0 : index
    %5 = vector.load %arg3[%c0_3, %c0_4] : memref<27x32xbf16, #tpu.memory_space<vmem>>, vector<27x32xbf16>
    %cst = arith.constant dense<0.000000e+00> : vector<512x32xf32>
    %6 = tpu.matmul %4, %5, %cst {dimension_numbers = #tpu.dot_dimension_numbers<[1], [0], [0], [1], [0, 0, 1, 1], [], []>} : vector<512x27xbf16>, vector<27x32xbf16>, vector<512x32xf32> -> vector<512x32xf32>
    %c0_5 = arith.constant 0 : index
    %c0_6 = arith.constant 0 : index
    %7 = vector.load %arg4[%c0_5, %c0_6] : memref<1x32xf32, #tpu.memory_space<vmem>>, vector<1x32xf32>
    %8 = vector.broadcast %7 : vector<1x32xf32> to vector<512x32xf32>
    %9 = arith.addf %6, %8 : vector<512x32xf32>
    %10 = arith.truncf %9 : vector<512x32xf32> to vector<512x32xbf16>
    %11 = arith.negf %10 : vector<512x32xbf16>
    %12 = math.exp %11 : vector<512x32xbf16>
    %cst_7 = arith.constant 1.000000e+00 : bf16
    %13 = vector.broadcast %cst_7 : bf16 to vector<512x32xbf16>
    %14 = arith.addf %13, %12 : vector<512x32xbf16>
    %15 = arith.divf %13, %14 : vector<512x32xbf16>
    %16 = arith.extf %15 : vector<512x32xbf16> to vector<512x32xf32>
    %17 = arith.mulf %9, %16 : vector<512x32xf32>
    %18 = arith.truncf %17 : vector<512x32xf32> to vector<512x32xbf16>
    %c0_8 = arith.constant 0 : index
    %c0_9 = arith.constant 0 : index
    %19 = vector.load %arg5[%c0_8, %c0_9] : memref<32x128xbf16, #tpu.memory_space<vmem>>, vector<32x128xbf16>
    %cst_10 = arith.constant dense<0.000000e+00> : vector<512x128xf32>
    %20 = tpu.matmul %18, %19, %cst_10 {dimension_numbers = #tpu.dot_dimension_numbers<[1], [0], [0], [1], [0, 0, 1, 1], [], []>} : vector<512x32xbf16>, vector<32x128xbf16>, vector<512x128xf32> -> vector<512x128xf32>
    %c0_11 = arith.constant 0 : index
    %c0_12 = arith.constant 0 : index
    %21 = vector.load %arg6[%c0_11, %c0_12] : memref<1x128xf32, #tpu.memory_space<vmem>>, vector<1x128xf32>
    %22 = vector.broadcast %21 : vector<1x128xf32> to vector<512x128xf32>
    %23 = arith.addf %20, %22 : vector<512x128xf32>
    %24 = arith.truncf %23 : vector<512x128xf32> to vector<512x128xbf16>
    %25 = arith.negf %24 : vector<512x128xbf16>
    %26 = math.exp %25 : vector<512x128xbf16>
    %cst_13 = arith.constant 1.000000e+00 : bf16
    %27 = vector.broadcast %cst_13 : bf16 to vector<512x128xbf16>
    %28 = arith.addf %27, %26 : vector<512x128xbf16>
    %29 = arith.divf %27, %28 : vector<512x128xbf16>
    %30 = arith.extf %29 : vector<512x128xbf16> to vector<512x128xf32>
    %31 = arith.mulf %23, %30 : vector<512x128xf32>
    %c0_14 = arith.constant 0 : index
    %c0_15 = arith.constant 0 : index
    %32 = vector.load %arg8[%c0_14, %c0_15] : memref<8x128xf32, #tpu.memory_space<vmem>>, vector<8x128xf32>
    %33 = vector.shape_cast %31 : vector<512x128xf32> to vector<8x64x128xf32>
    %cst_16 = arith.constant dense<0.000000e+00> : vector<8x128xf32>
    %34 = vector.multi_reduction <add>, %33, %cst_16 [1] : vector<8x64x128xf32> to vector<8x128xf32>
    %35 = arith.addf %32, %34 : vector<8x128xf32>
    %c0_17 = arith.constant 0 : index
    %c0_18 = arith.constant 0 : index
    %36 = vector.load %arg8[%c0_17, %c0_18] : memref<8x128xf32, #tpu.memory_space<vmem>>, vector<8x128xf32>
    tpu.vector_store %arg8[%c0_17, %c0_18], %35 {strides = array<i32>} : memref<8x128xf32, #tpu.memory_space<vmem>>, vector<8x128xf32>,
    %c0_i32_19 = arith.constant 0 : i32
    %37 = arith.cmpi eq, %arg1, %c0_i32_19 : i32
    %38 = arith.extui %37 : i1 to i32
    %c0_i32_20 = arith.constant 0 : i32
    %39 = arith.cmpi ne, %38, %c0_i32_20 : i32
    scf.if %39 {
      %c0_21 = arith.constant 0 : index
      %c0_22 = arith.constant 0 : index
      %40 = vector.load %arg8[%c0_21, %c0_22] : memref<8x128xf32, #tpu.memory_space<vmem>>, vector<8x128xf32>
      %cst_23 = arith.constant 1.562500e-02 : f32
      %41 = vector.broadcast %cst_23 : f32 to vector<8x128xf32>
      %42 = arith.mulf %40, %41 : vector<8x128xf32>
      %43 = arith.truncf %42 : vector<8x128xf32> to vector<8x128xbf16>
      %c0_24 = arith.constant 0 : index
      %c0_25 = arith.constant 0 : index
      %44 = vector.load %arg7[%c0_24, %c0_25] : memref<8x128xbf16, #tpu.memory_space<vmem>>, vector<8x128xbf16>
      tpu.vector_store %arg7[%c0_24, %c0_25], %43 {strides = array<i32>} : memref<8x128xbf16, #tpu.memory_space<vmem>>, vector<8x128xbf16>,
    } else {
    }
    return
  }
  func.func @transform_0(%arg0: i32, %arg1: i32) -> (i32, i32, i32) {
    %c0_i32 = arith.constant 0 : i32
    %c0_i32_0 = arith.constant 0 : i32
    return %arg0, %arg1, %c0_i32 : i32, i32, i32
  }
  func.func @transform_1(%arg0: i32, %arg1: i32) -> (i32, i32) {
    %c0_i32 = arith.constant 0 : i32
    %c0_i32_0 = arith.constant 0 : i32
    %c0_i32_1 = arith.constant 0 : i32
    return %c0_i32, %c0_i32_0 : i32, i32
  }
  func.func @transform_2(%arg0: i32, %arg1: i32) -> (i32, i32) {
    %c0_i32 = arith.constant 0 : i32
    %c0_i32_0 = arith.constant 0 : i32
    %c0_i32_1 = arith.constant 0 : i32
    return %c0_i32, %c0_i32_0 : i32, i32
  }
  func.func @transform_3(%arg0: i32, %arg1: i32) -> (i32, i32) {
    %c0_i32 = arith.constant 0 : i32
    %c0_i32_0 = arith.constant 0 : i32
    %c0_i32_1 = arith.constant 0 : i32
    return %c0_i32, %c0_i32_0 : i32, i32
  }
  func.func @transform_4(%arg0: i32, %arg1: i32) -> (i32, i32) {
    %c0_i32 = arith.constant 0 : i32
    %c0_i32_0 = arith.constant 0 : i32
    %c0_i32_1 = arith.constant 0 : i32
    return %c0_i32, %c0_i32_0 : i32, i32
  }
  func.func @transform_5(%arg0: i32, %arg1: i32) -> (i32, i32) {
    %c0_i32 = arith.constant 0 : i32
    %c0_i32_0 = arith.constant 0 : i32
    return %arg0, %c0_i32 : i32, i32
  }
}

</mosaic_0001>

<llo_original>
// kernel: tpu_custom_call.1
$region0: #{tpu_custom_call.1}
  #allocation0 [shape = 'u32[]', space=smem, size = 0x4, offset = 0x4, fixed_abs, tag = 'smem constant byte address 0x4 - core index']
  #allocation1 [shape = 'u32[144,128]{1,0:T(1,128)}', space=vmem, size = 0x12000, scoped, tag = 'internal scratch']
  #allocation2 [shape = 'f32[8,128]{1,0:T(8,128)}', space=vmem, size = 0x1000, scoped, tag = 'scratch operand']
  %s0 = inlined_call_operand.vmem [shape: bf16[8,64,27], index: 0, kind: input, shape index: {}]
  %s1 = inlined_call_operand.vmem [shape: bf16[27,32], index: 1, kind: input, shape index: {}]
  %s2 = inlined_call_operand.vmem [shape: f32[1,32], index: 2, kind: input, shape index: {}]
  %s3 = inlined_call_operand.vmem [shape: bf16[32,128], index: 3, kind: input, shape index: {}]
  %s4 = inlined_call_operand.vmem [shape: f32[1,128], index: 4, kind: input, shape index: {}]
  %s5 = inlined_call_operand.hbm [shape: bf16[8,128], index: 5, kind: output, shape index: {}]
  %s6 = sld [smem:[#allocation0]]
  $region38: #{tpu_custom_call.1} parent=0
    _
  %s8 = ssub.s32 1, %s6
  %s9 = scalar_select 0, %s8, %s6
  $region1: #{tpu_custom_call.1} parent=0
    #allocation3 [shape = 'u8[2048]{0}', space=vmem, size = 0x800, scoped, tag = 'output window, operand 0, single buffered']
    #allocation4 [shape = 's32[1]{0}', space=sflag, size = 0x4, scoped, tag = 'scoped memory for tpu_custom_call.1']
    %10 = vsyncpa [#allocation4], 0
    // Predicated region
    $region2: #{tpu_custom_call.1} parent=1 // pred_check
      _
    $region3: #{tpu_custom_call.1} parent=1 // pred_check_branch
      %12 = sbr.rel (0) target = $region5
    $region4: #{tpu_custom_call.1} parent=1 // pred_region
      _
    $region5: #{tpu_custom_call.1} parent=1 // pred_fallthru
      _
    // Predicated region
    $region6: #{tpu_custom_call.1} parent=1 // pred_check
      _
    $region7: #{tpu_custom_call.1} parent=1 // pred_check_branch
      %14 = sbr.rel (0) target = $region9
    $region8: #{tpu_custom_call.1} parent=1 // pred_region
      _
    $region9: #{tpu_custom_call.1} parent=1 // pred_fallthru
      _
    // Predicated region
    $region10: #{tpu_custom_call.1} parent=1 // pred_check
      _
    $region11: #{tpu_custom_call.1} parent=1 // pred_check_branch
      %16 = sbr.rel (0) target = $region13
    $region12: #{tpu_custom_call.1} parent=1 // pred_region
      _
    $region13: #{tpu_custom_call.1} parent=1 // pred_fallthru
      _
    // Predicated region
    $region14: #{tpu_custom_call.1} parent=1 // pred_check
      _
    $region15: #{tpu_custom_call.1} parent=1 // pred_check_branch
      %18 = sbr.rel (0) target = $region17
    $region16: #{tpu_custom_call.1} parent=1 // pred_region
      _
    $region17: #{tpu_custom_call.1} parent=1 // pred_fallthru
      _
    // Predicated region
    $region18: #{tpu_custom_call.1} parent=1 // pred_check
      _
    $region19: #{tpu_custom_call.1} parent=1 // pred_check_branch
      %20 = sbr.rel (0) target = $region21
    $region20: #{tpu_custom_call.1} parent=1 // pred_region
      _
    $region21: #{tpu_custom_call.1} parent=1 // pred_fallthru
      _
    %p23 = scmp.eq.s32.totalorder 0, 0
    // Predicated region
    $region22: #{tpu_custom_call.1} parent=1 // pred_check
      %p24 = pneg %p23
    $region23: #{tpu_custom_call.1} parent=1 // pred_check_branch
      %26 = sbr.rel (%p24) target = $region25
    $region24: #{tpu_custom_call.1} parent=1 // pred_region
      %27 = vst [vmem:[#allocation2] sm:$0xff] 0.0
    $region25: #{tpu_custom_call.1} parent=1 // pred_fallthru
      _
    %v28 = vld [vmem:[%s0] sm:$0xf]
    %v29 = vld [vmem:[%s0 + $0x4] sm:$0xf]
    %v30 = vld [vmem:[%s0 + $0x8] sm:$0xf]
    %v31 = vld [vmem:[%s0 + $0xc] sm:$0xf]
    %v32 = vld [vmem:[%s0 + $0x10] sm:$0xf]
    %v33 = vld [vmem:[%s0 + $0x14] sm:$0xf]
    %v34 = vld [vmem:[%s0 + $0x18] sm:$0xf]
    %v35 = vld [vmem:[%s0 + $0x1c] sm:$0xf]
    %v36 = vld [vmem:[%s0 + $0x20] sm:$0xf]
    %v37 = vld [vmem:[%s0 + $0x24] sm:$0xf]
    %v38 = vld [vmem:[%s0 + $0x28] sm:$0xf]
    %v39 = vld [vmem:[%s0 + $0x2c] sm:$0xf]
    %v40 = vld [vmem:[%s0 + $0x30] sm:$0xf]
    %v41 = vld [vmem:[%s0 + $0x34] sm:$0xf]
    %v42 = vld [vmem:[%s0 + $0x38] sm:$0xf]
    %v43 = vld [vmem:[%s0 + $0x3c] sm:$0xf]
    %v44 = vld [vmem:[%s0 + $0x40] sm:$0xf]
    %v45 = vld [vmem:[%s0 + $0x44] sm:$0xf]
    %v46 = vld [vmem:[%s0 + $0x48] sm:$0xf]
    %v47 = vld [vmem:[%s0 + $0x4c] sm:$0xf]
    %v48 = vld [vmem:[%s0 + $0x50] sm:$0xf]
    %v49 = vld [vmem:[%s0 + $0x54] sm:$0xf]
    %v50 = vld [vmem:[%s0 + $0x58] sm:$0xf]
    %v51 = vld [vmem:[%s0 + $0x5c] sm:$0xf]
    %v52 = vld [vmem:[%s0 + $0x60] sm:$0xf]
    %v53 = vld [vmem:[%s0 + $0x64] sm:$0xf]
    %v54 = vld [vmem:[%s0 + $0x68] sm:$0xf]
    %v55 = vld [vmem:[%s0 + $0x6c] sm:$0xf]
    %v56 = vld [vmem:[%s0 + $0x70] sm:$0xf]
    %v57 = vld [vmem:[%s0 + $0x74] sm:$0xf]
    %v58 = vld [vmem:[%s0 + $0x78] sm:$0xf]
    %v59 = vld [vmem:[%s0 + $0x7c] sm:$0xf]
    %v60 = vld [vmem:[%s0 + $0x80] sm:$0xf]
    %v61 = vld [vmem:[%s0 + $0x84] sm:$0xf]
    %v62 = vld [vmem:[%s0 + $0x88] sm:$0xf]
    %v63 = vld [vmem:[%s0 + $0x8c] sm:$0xf]
    %v64 = vld [vmem:[%s0 + $0x90] sm:$0xf]
    %v65 = vld [vmem:[%s0 + $0x94] sm:$0xf]
    %v66 = vld [vmem:[%s0 + $0x98] sm:$0xf]
    %v67 = vld [vmem:[%s0 + $0x9c] sm:$0xf]
    %v68 = vld [vmem:[%s0 + $0xa0] sm:$0xf]
    %v69 = vld [vmem:[%s0 + $0xa4] sm:$0xf]
    %v70 = vld [vmem:[%s0 + $0xa8] sm:$0xf]
    %v71 = vld [vmem:[%s0 + $0xac] sm:$0xf]
    %v72 = vld [vmem:[%s0 + $0xb0] sm:$0xf]
    %v73 = vld [vmem:[%s0 + $0xb4] sm:$0xf]
    %v74 = vld [vmem:[%s0 + $0xb8] sm:$0xf]
    %v75 = vld [vmem:[%s0 + $0xbc] sm:$0xf]
    %v76 = vld [vmem:[%s0 + $0xc0] sm:$0xf]
    %v77 = vld [vmem:[%s0 + $0xc4] sm:$0xf]
    %v78 = vld [vmem:[%s0 + $0xc8] sm:$0xf]
    %v79 = vld [vmem:[%s0 + $0xcc] sm:$0xf]
    %v80 = vld [vmem:[%s0 + $0xd0] sm:$0xf]
    %v81 = vld [vmem:[%s0 + $0xd4] sm:$0xf]
    %v82 = vld [vmem:[%s0 + $0xd8] sm:$0xf]
    %v83 = vld [vmem:[%s0 + $0xdc] sm:$0xf]
    %v84 = vld [vmem:[%s0 + $0xe0] sm:$0xf]
    %v85 = vld [vmem:[%s0 + $0xe4] sm:$0xf]
    %v86 = vld [vmem:[%s0 + $0xe8] sm:$0xf]
    %v87 = vld [vmem:[%s0 + $0xec] sm:$0xf]
    %v88 = vld [vmem:[%s0 + $0xf0] sm:$0xf]
    %v89 = vld [vmem:[%s0 + $0xf4] sm:$0xf]
    %v90 = vld [vmem:[%s0 + $0xf8] sm:$0xf]
    %v91 = vld [vmem:[%s0 + $0xfc] sm:$0xf]
    %v92 = vld [vmem:[%s1] sm:$0xf]
    %v93 = vld [vmem:[%s1 + $0x4] sm:$0xf]
    %v94 = vld [vmem:[%s1 + $0x8] sm:$0xf]
    %v95 = vld [vmem:[%s1 + $0xc] sm:$0x3]
    %v96 = vld [vmem:[%s2] sm:$0x1]
    %v98 = vlaneseq
    %v99 = vshrl.u32 %v98, 7
    %v100 = vsub.s32 0, %v99
    %v101 = vrot.slane %v96, %v100
    %v167 = vunpack.c.l.b16 %v28
    %v168 = vunpack.c.l.b16 %v29
    %v169 = vunpack.c.l.b16 %v30
    %v170 = vunpack.c.l.b16 %v31
    %v171 = vunpack.c.l.b16 %v32
    %v172 = vunpack.c.l.b16 %v33
    %v173 = vunpack.c.l.b16 %v34
    %v174 = vunpack.c.l.b16 %v35
    %v175 = vunpack.c.l.b16 %v36
    %v176 = vunpack.c.l.b16 %v37
    %v177 = vunpack.c.l.b16 %v38
    %v178 = vunpack.c.l.b16 %v39
    %v179 = vunpack.c.l.b16 %v40
    %v180 = vunpack.c.l.b16 %v41
    %v181 = vunpack.c.l.b16 %v42
    %v182 = vunpack.c.l.b16 %v43
    %v183 = vunpack.c.l.b16 %v44
    %v184 = vunpack.c.l.b16 %v45
    %v185 = vunpack.c.l.b16 %v46
    %v186 = vunpack.c.l.b16 %v47
    %v187 = vunpack.c.l.b16 %v48
    %v188 = vunpack.c.l.b16 %v49
    %v189 = vunpack.c.l.b16 %v50
    %v190 = vunpack.c.l.b16 %v51
    %v191 = vunpack.c.l.b16 %v52
    %v192 = vunpack.c.l.b16 %v53
    %v193 = vunpack.c.l.b16 %v54
    %v194 = vunpack.c.l.b16 %v55
    %v195 = vunpack.c.l.b16 %v56
    %v196 = vunpack.c.l.b16 %v57
    %v197 = vunpack.c.l.b16 %v58
    %v198 = vunpack.c.l.b16 %v59
    %v199 = vunpack.c.l.b16 %v60
    %v200 = vunpack.c.l.b16 %v61
    %v201 = vunpack.c.l.b16 %v62
    %v202 = vunpack.c.l.b16 %v63
    %v203 = vunpack.c.l.b16 %v64
    %v204 = vunpack.c.l.b16 %v65
    %v205 = vunpack.c.l.b16 %v66
    %v206 = vunpack.c.l.b16 %v67
    %v207 = vunpack.c.l.b16 %v68
    %v208 = vunpack.c.l.b16 %v69
    %v209 = vunpack.c.l.b16 %v70
    %v210 = vunpack.c.l.b16 %v71
    %v211 = vunpack.c.l.b16 %v72
    %v212 = vunpack.c.l.b16 %v73
    %v213 = vunpack.c.l.b16 %v74
    %v214 = vunpack.c.l.b16 %v75
    %v215 = vunpack.c.l.b16 %v76
    %v216 = vunpack.c.l.b16 %v77
    %v217 = vunpack.c.l.b16 %v78
    %v218 = vunpack.c.l.b16 %v79
    %v219 = vunpack.c.l.b16 %v80
    %v220 = vunpack.c.l.b16 %v81
    %v221 = vunpack.c.l.b16 %v82
    %v222 = vunpack.c.l.b16 %v83
    %v223 = vunpack.c.l.b16 %v84
    %v224 = vunpack.c.l.b16 %v85
    %v225 = vunpack.c.l.b16 %v86
    %v226 = vunpack.c.l.b16 %v87
    %v227 = vunpack.c.l.b16 %v88
    %v228 = vunpack.c.l.b16 %v89
    %v229 = vunpack.c.l.b16 %v90
    %v230 = vunpack.c.l.b16 %v91
    %v231 = vpack.c.b16 %v168, %v167
    %v232 = vpack.c.b16 %v170, %v169
    %v233 = vpack.c.b16 %v172, %v171
    %v234 = vpack.c.b16 %v174, %v173
    %v235 = vpack.c.b16 %v176, %v175
    %v236 = vpack.c.b16 %v178, %v177
    %v237 = vpack.c.b16 %v180, %v179
    %v238 = vpack.c.b16 %v182, %v181
    %v239 = vpack.c.b16 %v184, %v183
    %v240 = vpack.c.b16 %v186, %v185
    %v241 = vpack.c.b16 %v188, %v187
    %v242 = vpack.c.b16 %v190, %v189
    %v243 = vpack.c.b16 %v192, %v191
    %v244 = vpack.c.b16 %v194, %v193
    %v245 = vpack.c.b16 %v196, %v195
    %v246 = vpack.c.b16 %v198, %v197
    %v247 = vpack.c.b16 %v200, %v199
    %v248 = vpack.c.b16 %v202, %v201
    %v249 = vpack.c.b16 %v204, %v203
    %v250 = vpack.c.b16 %v206, %v205
    %v251 = vpack.c.b16 %v208, %v207
    %v252 = vpack.c.b16 %v210, %v209
    %v253 = vpack.c.b16 %v212, %v211
    %v254 = vpack.c.b16 %v214, %v213
    %v255 = vpack.c.b16 %v216, %v215
    %v256 = vpack.c.b16 %v218, %v217
    %v257 = vpack.c.b16 %v220, %v219
    %v258 = vpack.c.b16 %v222, %v221
    %v259 = vpack.c.b16 %v224, %v223
    %v260 = vpack.c.b16 %v226, %v225
    %v261 = vpack.c.b16 %v228, %v227
    %v262 = vpack.c.b16 %v230, %v229
    %v267 = vunpack.c.l.b16 %v92
    %v268 = vunpack.c.l.b16 %v93
    %v269 = vunpack.c.l.b16 %v94
    %v270 = vunpack.c.l.b16 %v95
    %v271 = vpack.c.b16 %v268, %v267
    %v272 = vpack.c.b16 %v270, %v269
    %vm274 = vcmask 220160
    %v276 = vsel %vm274, %v231, 0
    %v279 = vsel %vm274, %v232, 0
    %v282 = vsel %vm274, %v233, 0
    %v285 = vsel %vm274, %v234, 0
    %v288 = vsel %vm274, %v235, 0
    %v291 = vsel %vm274, %v236, 0
    %v294 = vsel %vm274, %v237, 0
    %v297 = vsel %vm274, %v238, 0
    %v300 = vsel %vm274, %v239, 0
    %v303 = vsel %vm274, %v240, 0
    %v306 = vsel %vm274, %v241, 0
    %v309 = vsel %vm274, %v242, 0
    %v312 = vsel %vm274, %v243, 0
    %v315 = vsel %vm274, %v244, 0
    %v318 = vsel %vm274, %v245, 0
    %v321 = vsel %vm274, %v246, 0
    %v324 = vsel %vm274, %v247, 0
    %v327 = vsel %vm274, %v248, 0
    %v330 = vsel %vm274, %v249, 0
    %v333 = vsel %vm274, %v250, 0
    %v336 = vsel %vm274, %v251, 0
    %v339 = vsel %vm274, %v252, 0
    %v342 = vsel %vm274, %v253, 0
    %v345 = vsel %vm274, %v254, 0
    %v348 = vsel %vm274, %v255, 0
    %v351 = vsel %vm274, %v256, 0
    %v354 = vsel %vm274, %v257, 0
    %v357 = vsel %vm274, %v258, 0
    %v360 = vsel %vm274, %v259, 0
    %v363 = vsel %vm274, %v260, 0
    %v366 = vsel %vm274, %v261, 0
    %v369 = vsel %vm274, %v262, 0
    %vm371 = vcmask 1044480
    %vm372 = vcmask 1045504
    %v373 = vsel %vm371, 4294967295, 65535
    %v374 = vsel %vm372, %v373, 0
    %v376 = vand.u32 %v272, %v374
    %378 = vmatprep.subr.bf16.mxu0 0
    %379 = vmatpush1.bf16.msra.mxu0 %v271
    %380 = vmatprep.subr.bf16.mxu0 0
    %381 = vmatpush1.bf16.msra.mxu0 %v376
    %382 = vmatprep.subr.bf16.mxu0 0
    %383 = vmatpush1.bf16.msra.mxu0 0
    %384 = vmatprep.subr.bf16.mxu0 0
    %385 = vmatpush1.bf16.msra.mxu0 0
    %386 = vmatprep.subr.bf16.mxu0 0
    %387 = vmatpush1.bf16.msra.mxu0 0
    %388 = vmatprep.subr.bf16.mxu0 0
    %389 = vmatpush1.bf16.msra.mxu0 0
    %390 = vmatprep.subr.bf16.mxu0 0
    %391 = vmatpush1.bf16.msra.mxu0 0
    %392 = vmatprep.subr.bf16.mxu0 0
    %393 = vmatpush1.bf16.msra.mxu0 0
    %394 = vmatprep.subr.bf16.mxu0 0
    %395 = vmatpush1.bf16.msra.mxu0 0
    %396 = vmatprep.subr.bf16.mxu0 0
    %397 = vmatpush1.bf16.msra.mxu0 0
    %398 = vmatprep.subr.bf16.mxu0 0
    %399 = vmatpush1.bf16.msra.mxu0 0
    %400 = vmatprep.subr.bf16.mxu0 0
    %401 = vmatpush1.bf16.msra.mxu0 0
    %402 = vmatprep.subr.bf16.mxu0 0
    %403 = vmatpush1.bf16.msra.mxu0 0
    %404 = vmatprep.subr.bf16.mxu0 0
    %405 = vmatpush1.bf16.msra.mxu0 0
    %406 = vmatprep.subr.bf16.mxu0 0
    %407 = vmatpush1.bf16.msra.mxu0 0
    %408 = vmatprep.subr.bf16.mxu0 0
    %409 = vmatpush1.bf16.msra.mxu0 0
    %410 = vmatprep.mubr.bf16.mxu0 0
    %411 = vmatmul.mubr.bf16.gmra.mrb[0].mxu0 %v276
    %v412 = vpop.f32.mrb[0].mxu0
    %v413 = vadd.f32 %v101, %v412
    %v414 = vpop.f32.mrb[0].mxu0
    %v415 = vpop.f32.mrb[0].mxu0
    %v416 = vadd.f32 %v101, %v415
    %v417 = vpop.f32.mrb[0].mxu0
    %418 = vmatprep.mubr.bf16.mxu0 0
    %419 = vmatmul.mubr.bf16.gmra.mrb[0].mxu0 %v279
    %v420 = vpop.f32.mrb[0].mxu0
    %v421 = vadd.f32 %v101, %v420
    %v422 = vpop.f32.mrb[0].mxu0
    %v423 = vpop.f32.mrb[0].mxu0
    %v424 = vadd.f32 %v101, %v423
    %v425 = vpop.f32.mrb[0].mxu0
    %426 = vmatprep.mubr.bf16.mxu0 0
    %427 = vmatmul.mubr.bf16.gmra.mrb[0].mxu0 %v282
    %v428 = vpop.f32.mrb[0].mxu0
    %v429 = vadd.f32 %v101, %v428
    %v430 = vpop.f32.mrb[0].mxu0
    %v431 = vpop.f32.mrb[0].mxu0
    %v432 = vadd.f32 %v101, %v431
    %v433 = vpop.f32.mrb[0].mxu0
    %434 = vmatprep.mubr.bf16.mxu0 0
    %435 = vmatmul.mubr.bf16.gmra.mrb[0].mxu0 %v285
    %v436 = vpop.f32.mrb[0].mxu0
    %v437 = vadd.f32 %v101, %v436
    %v438 = vpop.f32.mrb[0].mxu0
    %v439 = vpop.f32.mrb[0].mxu0
    %v440 = vadd.f32 %v101, %v439
    %v441 = vpop.f32.mrb[0].mxu0
    %442 = vmatprep.mubr.bf16.mxu0 0
    %443 = vmatmul.mubr.bf16.gmra.mrb[0].mxu0 %v288
    %v444 = vpop.f32.mrb[0].mxu0
    %v445 = vadd.f32 %v101, %v444
    %v446 = vpop.f32.mrb[0].mxu0
    %v447 = vpop.f32.mrb[0].mxu0
    %v448 = vadd.f32 %v101, %v447
    %v449 = vpop.f32.mrb[0].mxu0
    %450 = vmatprep.mubr.bf16.mxu0 0
    %451 = vmatmul.mubr.bf16.gmra.mrb[0].mxu0 %v291
    %v452 = vpop.f32.mrb[0].mxu0
    %v453 = vadd.f32 %v101, %v452
    %v454 = vpop.f32.mrb[0].mxu0
    %v455 = vpop.f32.mrb[0].mxu0
    %v456 = vadd.f32 %v101, %v455
    %v457 = vpop.f32.mrb[0].mxu0
    %458 = vmatprep.mubr.bf16.mxu0 0
    %459 = vmatmul.mubr.bf16.gmra.mrb[0].mxu0 %v294
    %v460 = vpop.f32.mrb[0].mxu0
    %v461 = vadd.f32 %v101, %v460
    %v462 = vpop.f32.mrb[0].mxu0
    %v463 = vpop.f32.mrb[0].mxu0
    %v464 = vadd.f32 %v101, %v463
    %v465 = vpop.f32.mrb[0].mxu0
    %466 = vmatprep.mubr.bf16.mxu0 0
    %467 = vmatmul.mubr.bf16.gmra.mrb[0].mxu0 %v297
    %v468 = vpop.f32.mrb[0].mxu0
    %v469 = vadd.f32 %v101, %v468
    %v470 = vpop.f32.mrb[0].mxu0
    %v471 = vpop.f32.mrb[0].mxu0
    %v472 = vadd.f32 %v101, %v471
    %v473 = vpop.f32.mrb[0].mxu0
    %474 = vmatprep.mubr.bf16.mxu0 0
    %475 = vmatmul.mubr.bf16.gmra.mrb[0].mxu0 %v300
    %v476 = vpop.f32.mrb[0].mxu0
    %v477 = vadd.f32 %v101, %v476
    %v478 = vpop.f32.mrb[0].mxu0
    %v479 = vpop.f32.mrb[0].mxu0
    %v480 = vadd.f32 %v101, %v479
    %v481 = vpop.f32.mrb[0].mxu0
    %482 = vmatprep.mubr.bf16.mxu0 0
    %483 = vmatmul.mubr.bf16.gmra.mrb[0].mxu0 %v303
    %v484 = vpop.f32.mrb[0].mxu0
    %v485 = vadd.f32 %v101, %v484
    %v486 = vpop.f32.mrb[0].mxu0
    %v487 = vpop.f32.mrb[0].mxu0
    %v488 = vadd.f32 %v101, %v487
    %v489 = vpop.f32.mrb[0].mxu0
    %490 = vmatprep.mubr.bf16.mxu0 0
    %491 = vmatmul.mubr.bf16.gmra.mrb[0].mxu0 %v306
    %v492 = vpop.f32.mrb[0].mxu0
    %v493 = vadd.f32 %v101, %v492
    %v494 = vpop.f32.mrb[0].mxu0
    %v495 = vpop.f32.mrb[0].mxu0
    %v496 = vadd.f32 %v101, %v495
    %v497 = vpop.f32.mrb[0].mxu0
    %498 = vmatprep.mubr.bf16.mxu0 0
    %499 = vmatmul.mubr.bf16.gmra.mrb[0].mxu0 %v309
    %v500 = vpop.f32.mrb[0].mxu0
    %v501 = vadd.f32 %v101, %v500
    %v502 = vpop.f32.mrb[0].mxu0
    %v503 = vpop.f32.mrb[0].mxu0
    %v504 = vadd.f32 %v101, %v503
    %v505 = vpop.f32.mrb[0].mxu0
    %506 = vmatprep.mubr.bf16.mxu0 0
    %507 = vmatmul.mubr.bf16.gmra.mrb[0].mxu0 %v312
    %v508 = vpop.f32.mrb[0].mxu0
    %v509 = vadd.f32 %v101, %v508
    %v510 = vpop.f32.mrb[0].mxu0
    %v511 = vpop.f32.mrb[0].mxu0
    %v512 = vadd.f32 %v101, %v511
    %v513 = vpop.f32.mrb[0].mxu0
    %514 = vmatprep.mubr.bf16.mxu0 0
    %515 = vmatmul.mubr.bf16.gmra.mrb[0].mxu0 %v315
    %v516 = vpop.f32.mrb[0].mxu0
    %v517 = vadd.f32 %v101, %v516
    %v518 = vpop.f32.mrb[0].mxu0
    %v519 = vpop.f32.mrb[0].mxu0
    %v520 = vadd.f32 %v101, %v519
    %v521 = vpop.f32.mrb[0].mxu0
    %522 = vmatprep.mubr.bf16.mxu0 0
    %523 = vmatmul.mubr.bf16.gmra.mrb[0].mxu0 %v318
    %v524 = vpop.f32.mrb[0].mxu0
    %v525 = vadd.f32 %v101, %v524
    %v526 = vpop.f32.mrb[0].mxu0
    %v527 = vpop.f32.mrb[0].mxu0
    %v528 = vadd.f32 %v101, %v527
    %v529 = vpop.f32.mrb[0].mxu0
    %530 = vmatprep.mubr.bf16.mxu0 0
    %531 = vmatmul.mubr.bf16.gmra.mrb[0].mxu0 %v321
    %v532 = vpop.f32.mrb[0].mxu0
    %v533 = vadd.f32 %v101, %v532
    %v534 = vpop.f32.mrb[0].mxu0
    %v535 = vpop.f32.mrb[0].mxu0
    %v536 = vadd.f32 %v101, %v535
    %v537 = vpop.f32.mrb[0].mxu0
    %538 = vmatprep.mubr.bf16.mxu0 0
    %539 = vmatmul.mubr.bf16.gmra.mrb[0].mxu0 %v324
    %v540 = vpop.f32.mrb[0].mxu0
    %v541 = vadd.f32 %v101, %v540
    %v542 = vpop.f32.mrb[0].mxu0
    %v543 = vpop.f32.mrb[0].mxu0
    %v544 = vadd.f32 %v101, %v543
    %v545 = vpop.f32.mrb[0].mxu0
    %546 = vmatprep.mubr.bf16.mxu0 0
    %547 = vmatmul.mubr.bf16.gmra.mrb[0].mxu0 %v327
    %v548 = vpop.f32.mrb[0].mxu0
    %v549 = vadd.f32 %v101, %v548
    %v550 = vpop.f32.mrb[0].mxu0
    %v551 = vpop.f32.mrb[0].mxu0
    %v552 = vadd.f32 %v101, %v551
    %v553 = vpop.f32.mrb[0].mxu0
    %554 = vmatprep.mubr.bf16.mxu0 0
    %555 = vmatmul.mubr.bf16.gmra.mrb[0].mxu0 %v330
    %v556 = vpop.f32.mrb[0].mxu0
    %v557 = vadd.f32 %v101, %v556
    %v558 = vpop.f32.mrb[0].mxu0
    %v559 = vpop.f32.mrb[0].mxu0
    %v560 = vadd.f32 %v101, %v559
    %v561 = vpop.f32.mrb[0].mxu0
    %562 = vmatprep.mubr.bf16.mxu0 0
    %563 = vmatmul.mubr.bf16.gmra.mrb[0].mxu0 %v333
    %v564 = vpop.f32.mrb[0].mxu0
    %v565 = vadd.f32 %v101, %v564
    %v566 = vpop.f32.mrb[0].mxu0
    %v567 = vpop.f32.mrb[0].mxu0
    %v568 = vadd.f32 %v101, %v567
    %v569 = vpop.f32.mrb[0].mxu0
    %570 = vmatprep.mubr.bf16.mxu0 0
    %571 = vmatmul.mubr.bf16.gmra.mrb[0].mxu0 %v336
    %v572 = vpop.f32.mrb[0].mxu0
    %v573 = vadd.f32 %v101, %v572
    %v574 = vpop.f32.mrb[0].mxu0
    %v575 = vpop.f32.mrb[0].mxu0
    %v576 = vadd.f32 %v101, %v575
    %v577 = vpop.f32.mrb[0].mxu0
    %578 = vmatprep.mubr.bf16.mxu0 0
    %579 = vmatmul.mubr.bf16.gmra.mrb[0].mxu0 %v339
    %v580 = vpop.f32.mrb[0].mxu0
    %v581 = vadd.f32 %v101, %v580
    %v582 = vpop.f32.mrb[0].mxu0
    %v583 = vpop.f32.mrb[0].mxu0
    %v584 = vadd.f32 %v101, %v583
    %v585 = vpop.f32.mrb[0].mxu0
    %586 = vmatprep.mubr.bf16.mxu0 0
    %587 = vmatmul.mubr.bf16.gmra.mrb[0].mxu0 %v342
    %v588 = vpop.f32.mrb[0].mxu0
    %v589 = vadd.f32 %v101, %v588
    %v590 = vpop.f32.mrb[0].mxu0
    %v591 = vpop.f32.mrb[0].mxu0
    %v592 = vadd.f32 %v101, %v591
    %v593 = vpop.f32.mrb[0].mxu0
    %594 = vmatprep.mubr.bf16.mxu0 0
    %595 = vmatmul.mubr.bf16.gmra.mrb[0].mxu0 %v345
    %v596 = vpop.f32.mrb[0].mxu0
    %v597 = vadd.f32 %v101, %v596
    %v598 = vpop.f32.mrb[0].mxu0
    %v599 = vpop.f32.mrb[0].mxu0
    %v600 = vadd.f32 %v101, %v599
    %v601 = vpop.f32.mrb[0].mxu0
    %602 = vmatprep.mubr.bf16.mxu0 0
    %603 = vmatmul.mubr.bf16.gmra.mrb[0].mxu0 %v348
    %v604 = vpop.f32.mrb[0].mxu0
    %v605 = vadd.f32 %v101, %v604
    %v606 = vpop.f32.mrb[0].mxu0
    %v607 = vpop.f32.mrb[0].mxu0
    %v608 = vadd.f32 %v101, %v607
    %v609 = vpop.f32.mrb[0].mxu0
    %610 = vmatprep.mubr.bf16.mxu0 0
    %611 = vmatmul.mubr.bf16.gmra.mrb[0].mxu0 %v351
    %v612 = vpop.f32.mrb[0].mxu0
    %v613 = vadd.f32 %v101, %v612
    %v614 = vpop.f32.mrb[0].mxu0
    %v615 = vpop.f32.mrb[0].mxu0
    %v616 = vadd.f32 %v101, %v615
    %v617 = vpop.f32.mrb[0].mxu0
    %618 = vmatprep.mubr.bf16.mxu0 0
    %619 = vmatmul.mubr.bf16.gmra.mrb[0].mxu0 %v354
    %v620 = vpop.f32.mrb[0].mxu0
    %v621 = vadd.f32 %v101, %v620
    %v622 = vpop.f32.mrb[0].mxu0
    %v623 = vpop.f32.mrb[0].mxu0
    %v624 = vadd.f32 %v101, %v623
    %v625 = vpop.f32.mrb[0].mxu0
    %626 = vmatprep.mubr.bf16.mxu0 0
    %627 = vmatmul.mubr.bf16.gmra.mrb[0].mxu0 %v357
    %v628 = vpop.f32.mrb[0].mxu0
    %v629 = vadd.f32 %v101, %v628
    %v630 = vpop.f32.mrb[0].mxu0
    %v631 = vpop.f32.mrb[0].mxu0
    %v632 = vadd.f32 %v101, %v631
    %v633 = vpop.f32.mrb[0].mxu0
    %634 = vmatprep.mubr.bf16.mxu0 0
    %635 = vmatmul.mubr.bf16.gmra.mrb[0].mxu0 %v360
    %v636 = vpop.f32.mrb[0].mxu0
    %v637 = vadd.f32 %v101, %v636
    %v638 = vpop.f32.mrb[0].mxu0
    %v639 = vpop.f32.mrb[0].mxu0
    %v640 = vadd.f32 %v101, %v639
    %v641 = vpop.f32.mrb[0].mxu0
    %642 = vmatprep.mubr.bf16.mxu0 0
    %643 = vmatmul.mubr.bf16.gmra.mrb[0].mxu0 %v363
    %v644 = vpop.f32.mrb[0].mxu0
    %v645 = vadd.f32 %v101, %v644
    %v646 = vpop.f32.mrb[0].mxu0
    %v647 = vpop.f32.mrb[0].mxu0
    %v648 = vadd.f32 %v101, %v647
    %v649 = vpop.f32.mrb[0].mxu0
    %650 = vmatprep.mubr.bf16.mxu0 0
    %651 = vmatmul.mubr.bf16.gmra.mrb[0].mxu0 %v366
    %v652 = vpop.f32.mrb[0].mxu0
    %v653 = vadd.f32 %v101, %v652
    %v654 = vpop.f32.mrb[0].mxu0
    %v655 = vpop.f32.mrb[0].mxu0
    %v656 = vadd.f32 %v101, %v655
    %v657 = vpop.f32.mrb[0].mxu0
    %658 = vmatprep.mubr.bf16.mxu0 0
    %659 = vmatmul.mubr.bf16.gmra.mrb[0].mxu0 %v369
    %v660 = vpop.f32.mrb[0].mxu0
    %v661 = vadd.f32 %v101, %v660
    %v662 = vpop.f32.mrb[0].mxu0
    %v663 = vpop.f32.mrb[0].mxu0
    %v664 = vadd.f32 %v101, %v663
    %v665 = vpop.f32.mrb[0].mxu0
    %666 = vdwg.mxu0
    %v667 = vpack.c.bf16 %v416, %v413
    %v668 = vpack.c.bf16 %v424, %v421
    %v669 = vpack.c.bf16 %v432, %v429
    %v670 = vpack.c.bf16 %v440, %v437
    %v671 = vpack.c.bf16 %v448, %v445
    %v672 = vpack.c.bf16 %v456, %v453
    %v673 = vpack.c.bf16 %v464, %v461
    %v674 = vpack.c.bf16 %v472, %v469
    %v675 = vpack.c.bf16 %v480, %v477
    %v676 = vpack.c.bf16 %v488, %v485
    %v677 = vpack.c.bf16 %v496, %v493
    %v678 = vpack.c.bf16 %v504, %v501
    %v679 = vpack.c.bf16 %v512, %v509
    %v680 = vpack.c.bf16 %v520, %v517
    %v681 = vpack.c.bf16 %v528, %v525
    %v682 = vpack.c.bf16 %v536, %v533
    %v683 = vpack.c.bf16 %v544, %v541
    %v684 = vpack.c.bf16 %v552, %v549
    %v685 = vpack.c.bf16 %v560, %v557
    %v686 = vpack.c.bf16 %v568, %v565
    %v687 = vpack.c.bf16 %v576, %v573
    %v688 = vpack.c.bf16 %v584, %v581
    %v689 = vpack.c.bf16 %v592, %v589
    %v690 = vpack.c.bf16 %v600, %v597
    %v691 = vpack.c.bf16 %v608, %v605
    %v692 = vpack.c.bf16 %v616, %v613
    %v693 = vpack.c.bf16 %v624, %v621
    %v694 = vpack.c.bf16 %v632, %v629
    %v695 = vpack.c.bf16 %v640, %v637
    %v696 = vpack.c.bf16 %v648, %v645
    %v697 = vpack.c.bf16 %v656, %v653
    %v698 = vpack.c.bf16 %v664, %v661
    %v699 = vxor.u32 %v667, 2147516416
    %v700 = vxor.u32 %v668, 2147516416
    %v701 = vxor.u32 %v669, 2147516416
    %v702 = vxor.u32 %v670, 2147516416
    %v703 = vxor.u32 %v671, 2147516416
    %v704 = vxor.u32 %v672, 2147516416
    %v705 = vxor.u32 %v673, 2147516416
    %v706 = vxor.u32 %v674, 2147516416
    %v707 = vxor.u32 %v675, 2147516416
    %v708 = vxor.u32 %v676, 2147516416
    %v709 = vxor.u32 %v677, 2147516416
    %v710 = vxor.u32 %v678, 2147516416
    %v711 = vxor.u32 %v679, 2147516416
    %v712 = vxor.u32 %v680, 2147516416
    %v713 = vxor.u32 %v681, 2147516416
    %v714 = vxor.u32 %v682, 2147516416
    %v715 = vxor.u32 %v683, 2147516416
    %v716 = vxor.u32 %v684, 2147516416
    %v717 = vxor.u32 %v685, 2147516416
    %v718 = vxor.u32 %v686, 2147516416
    %v719 = vxor.u32 %v687, 2147516416
    %v720 = vxor.u32 %v688, 2147516416
    %v721 = vxor.u32 %v689, 2147516416
    %v722 = vxor.u32 %v690, 2147516416
    %v723 = vxor.u32 %v691, 2147516416
    %v724 = vxor.u32 %v692, 2147516416
    %v725 = vxor.u32 %v693, 2147516416
    %v726 = vxor.u32 %v694, 2147516416
    %v727 = vxor.u32 %v695, 2147516416
    %v728 = vxor.u32 %v696, 2147516416
    %v729 = vxor.u32 %v697, 2147516416
    %v730 = vxor.u32 %v698, 2147516416
    %v732 = vmul.bf16 %v699, 1069105081
    %v733 = vpow.bf16.pop %v732
    %v735 = vmul.bf16 %v700, 1069105081
    %v736 = vpow.bf16.pop %v735
    %v738 = vmul.bf16 %v701, 1069105081
    %v739 = vpow.bf16.pop %v738
    %v741 = vmul.bf16 %v702, 1069105081
    %v742 = vpow.bf16.pop %v741
    %v744 = vmul.bf16 %v703, 1069105081
    %v745 = vpow.bf16.pop %v744
    %v747 = vmul.bf16 %v704, 1069105081
    %v748 = vpow.bf16.pop %v747
    %v750 = vmul.bf16 %v705, 1069105081
    %v751 = vpow.bf16.pop %v750
    %v753 = vmul.bf16 %v706, 1069105081
    %v754 = vpow.bf16.pop %v753
    %v756 = vmul.bf16 %v707, 1069105081
    %v757 = vpow.bf16.pop %v756
    %v759 = vmul.bf16 %v708, 1069105081
    %v760 = vpow.bf16.pop %v759
    %v762 = vmul.bf16 %v709, 1069105081
    %v763 = vpow.bf16.pop %v762
    %v765 = vmul.bf16 %v710, 1069105081
    %v766 = vpow.bf16.pop %v765
    %v768 = vmul.bf16 %v711, 1069105081
    %v769 = vpow.bf16.pop %v768
    %v771 = vmul.bf16 %v712, 1069105081
    %v772 = vpow.bf16.pop %v771
    %v774 = vmul.bf16 %v713, 1069105081
    %v775 = vpow.bf16.pop %v774
    %v777 = vmul.bf16 %v714, 1069105081
    %v778 = vpow.bf16.pop %v777
    %v780 = vmul.bf16 %v715, 1069105081
    %v781 = vpow.bf16.pop %v780
    %v783 = vmul.bf16 %v716, 1069105081
    %v784 = vpow.bf16.pop %v783
    %v786 = vmul.bf16 %v717, 1069105081
    %v787 = vpow.bf16.pop %v786
    %v789 = vmul.bf16 %v718, 1069105081
    %v790 = vpow.bf16.pop %v789
    %v792 = vmul.bf16 %v719, 1069105081
    %v793 = vpow.bf16.pop %v792
    %v795 = vmul.bf16 %v720, 1069105081
    %v796 = vpow.bf16.pop %v795
    %v798 = vmul.bf16 %v721, 1069105081
    %v799 = vpow.bf16.pop %v798
    %v801 = vmul.bf16 %v722, 1069105081
    %v802 = vpow.bf16.pop %v801
    %v804 = vmul.bf16 %v723, 1069105081
    %v805 = vpow.bf16.pop %v804
    %v807 = vmul.bf16 %v724, 1069105081
    %v808 = vpow.bf16.pop %v807
    %v810 = vmul.bf16 %v725, 1069105081
    %v811 = vpow.bf16.pop %v810
    %v813 = vmul.bf16 %v726, 1069105081
    %v814 = vpow.bf16.pop %v813
    %v816 = vmul.bf16 %v727, 1069105081
    %v817 = vpow.bf16.pop %v816
    %v819 = vmul.bf16 %v728, 1069105081
    %v820 = vpow.bf16.pop %v819
    %v822 = vmul.bf16 %v729, 1069105081
    %v823 = vpow.bf16.pop %v822
    %v825 = vmul.bf16 %v730, 1069105081
    %v826 = vpow.bf16.pop %v825
    %v827 = vadd.bf16 %v733, 1065369472
    %v828 = vadd.bf16 %v736, 1065369472
    %v829 = vadd.bf16 %v739, 1065369472
    %v830 = vadd.bf16 %v742, 1065369472
    %v831 = vadd.bf16 %v745, 1065369472
    %v832 = vadd.bf16 %v748, 1065369472
    %v833 = vadd.bf16 %v751, 1065369472
    %v834 = vadd.bf16 %v754, 1065369472
    %v835 = vadd.bf16 %v757, 1065369472
    %v836 = vadd.bf16 %v760, 1065369472
    %v837 = vadd.bf16 %v763, 1065369472
    %v838 = vadd.bf16 %v766, 1065369472
    %v839 = vadd.bf16 %v769, 1065369472
    %v840 = vadd.bf16 %v772, 1065369472
    %v841 = vadd.bf16 %v775, 1065369472
    %v842 = vadd.bf16 %v778, 1065369472
    %v843 = vadd.bf16 %v781, 1065369472
    %v844 = vadd.bf16 %v784, 1065369472
    %v845 = vadd.bf16 %v787, 1065369472
    %v846 = vadd.bf16 %v790, 1065369472
    %v847 = vadd.bf16 %v793, 1065369472
    %v848 = vadd.bf16 %v796, 1065369472
    %v849 = vadd.bf16 %v799, 1065369472
    %v850 = vadd.bf16 %v802, 1065369472
    %v851 = vadd.bf16 %v805, 1065369472
    %v852 = vadd.bf16 %v808, 1065369472
    %v853 = vadd.bf16 %v811, 1065369472
    %v854 = vadd.bf16 %v814, 1065369472
    %v855 = vadd.bf16 %v817, 1065369472
    %v856 = vadd.bf16 %v820, 1065369472
    %v857 = vadd.bf16 %v823, 1065369472
    %v858 = vadd.bf16 %v826, 1065369472
    %v859 = vrcp.bf16.pop %v827
    %v860 = vmul.bf16 1065369472, %v859
    %v861 = vrcp.bf16.pop %v828
    %v862 = vmul.bf16 1065369472, %v861
    %v863 = vrcp.bf16.pop %v829
    %v864 = vmul.bf16 1065369472, %v863
    %v865 = vrcp.bf16.pop %v830
    %v866 = vmul.bf16 1065369472, %v865
    %v867 = vrcp.bf16.pop %v831
    %v868 = vmul.bf16 1065369472, %v867
    %v869 = vrcp.bf16.pop %v832
    %v870 = vmul.bf16 1065369472, %v869
    %v871 = vrcp.bf16.pop %v833
    %v872 = vmul.bf16 1065369472, %v871
    %v873 = vrcp.bf16.pop %v834
    %v874 = vmul.bf16 1065369472, %v873
    %v875 = vrcp.bf16.pop %v835
    %v876 = vmul.bf16 1065369472, %v875
    %v877 = vrcp.bf16.pop %v836
    %v878 = vmul.bf16 1065369472, %v877
    %v879 = vrcp.bf16.pop %v837
    %v880 = vmul.bf16 1065369472, %v879
    %v881 = vrcp.bf16.pop %v838
    %v882 = vmul.bf16 1065369472, %v881
    %v883 = vrcp.bf16.pop %v839
    %v884 = vmul.bf16 1065369472, %v883
    %v885 = vrcp.bf16.pop %v840
    %v886 = vmul.bf16 1065369472, %v885
    %v887 = vrcp.bf16.pop %v841
    %v888 = vmul.bf16 1065369472, %v887
    %v889 = vrcp.bf16.pop %v842
    %v890 = vmul.bf16 1065369472, %v889
    %v891 = vrcp.bf16.pop %v843
    %v892 = vmul.bf16 1065369472, %v891
    %v893 = vrcp.bf16.pop %v844
    %v894 = vmul.bf16 1065369472, %v893
    %v895 = vrcp.bf16.pop %v845
    %v896 = vmul.bf16 1065369472, %v895
    %v897 = vrcp.bf16.pop %v846
    %v898 = vmul.bf16 1065369472, %v897
    %v899 = vrcp.bf16.pop %v847
    %v900 = vmul.bf16 1065369472, %v899
    %v901 = vrcp.bf16.pop %v848
    %v902 = vmul.bf16 1065369472, %v901
    %v903 = vrcp.bf16.pop %v849
    %v904 = vmul.bf16 1065369472, %v903
    %v905 = vrcp.bf16.pop %v850
    %v906 = vmul.bf16 1065369472, %v905
    %v907 = vrcp.bf16.pop %v851
    %v908 = vmul.bf16 1065369472, %v907
    %v909 = vrcp.bf16.pop %v852
    %v910 = vmul.bf16 1065369472, %v909
    %v911 = vrcp.bf16.pop %v853
    %v912 = vmul.bf16 1065369472, %v911
    %v913 = vrcp.bf16.pop %v854
    %v914 = vmul.bf16 1065369472, %v913
    %v915 = vrcp.bf16.pop %v855
    %v916 = vmul.bf16 1065369472, %v915
    %v917 = vrcp.bf16.pop %v856
    %v918 = vmul.bf16 1065369472, %v917
    %v919 = vrcp.bf16.pop %v857
    %v920 = vmul.bf16 1065369472, %v919
    %v921 = vrcp.bf16.pop %v858
    %v922 = vmul.bf16 1065369472, %v921
    %v923 = vunpack.c.l.bf16 %v860
    %v924 = vunpack.c.h.bf16 %v860
    %v925 = vunpack.c.l.bf16 %v862
    %v926 = vunpack.c.h.bf16 %v862
    %v927 = vunpack.c.l.bf16 %v864
    %v928 = vunpack.c.h.bf16 %v864
    %v929 = vunpack.c.l.bf16 %v866
    %v930 = vunpack.c.h.bf16 %v866
    %v931 = vunpack.c.l.bf16 %v868
    %v932 = vunpack.c.h.bf16 %v868
    %v933 = vunpack.c.l.bf16 %v870
    %v934 = vunpack.c.h.bf16 %v870
    %v935 = vunpack.c.l.bf16 %v872
    %v936 = vunpack.c.h.bf16 %v872
    %v937 = vunpack.c.l.bf16 %v874
    %v938 = vunpack.c.h.bf16 %v874
    %v939 = vunpack.c.l.bf16 %v876
    %v940 = vunpack.c.h.bf16 %v876
    %v941 = vunpack.c.l.bf16 %v878
    %v942 = vunpack.c.h.bf16 %v878
    %v943 = vunpack.c.l.bf16 %v880
    %v944 = vunpack.c.h.bf16 %v880
    %v945 = vunpack.c.l.bf16 %v882
    %v946 = vunpack.c.h.bf16 %v882
    %v947 = vunpack.c.l.bf16 %v884
    %v948 = vunpack.c.h.bf16 %v884
    %v949 = vunpack.c.l.bf16 %v886
    %v950 = vunpack.c.h.bf16 %v886
    %v951 = vunpack.c.l.bf16 %v888
    %v952 = vunpack.c.h.bf16 %v888
    %v953 = vunpack.c.l.bf16 %v890
    %v954 = vunpack.c.h.bf16 %v890
    %v955 = vunpack.c.l.bf16 %v892
    %v956 = vunpack.c.h.bf16 %v892
    %v957 = vunpack.c.l.bf16 %v894
    %v958 = vunpack.c.h.bf16 %v894
    %v959 = vunpack.c.l.bf16 %v896
    %v960 = vunpack.c.h.bf16 %v896
    %v961 = vunpack.c.l.bf16 %v898
    %v962 = vunpack.c.h.bf16 %v898
    %v963 = vunpack.c.l.bf16 %v900
    %v964 = vunpack.c.h.bf16 %v900
    %v965 = vunpack.c.l.bf16 %v902
    %v966 = vunpack.c.h.bf16 %v902
    %v967 = vunpack.c.l.bf16 %v904
    %v968 = vunpack.c.h.bf16 %v904
    %v969 = vunpack.c.l.bf16 %v906
    %v970 = vunpack.c.h.bf16 %v906
    %v971 = vunpack.c.l.bf16 %v908
    %v972 = vunpack.c.h.bf16 %v908
    %v973 = vunpack.c.l.bf16 %v910
    %v974 = vunpack.c.h.bf16 %v910
    %v975 = vunpack.c.l.bf16 %v912
    %v976 = vunpack.c.h.bf16 %v912
    %v977 = vunpack.c.l.bf16 %v914
    %v978 = vunpack.c.h.bf16 %v914
    %v979 = vunpack.c.l.bf16 %v916
    %v980 = vunpack.c.h.bf16 %v916
    %v981 = vunpack.c.l.bf16 %v918
    %v982 = vunpack.c.h.bf16 %v918
    %v983 = vunpack.c.l.bf16 %v920
    %v984 = vunpack.c.h.bf16 %v920
    %v985 = vunpack.c.l.bf16 %v922
    %v986 = vunpack.c.h.bf16 %v922
    %v987 = vmul.f32 %v413, %v923
    %v988 = vmul.f32 %v416, %v924
    %v989 = vmul.f32 %v421, %v925
    %v990 = vmul.f32 %v424, %v926
    %v991 = vmul.f32 %v429, %v927
    %v992 = vmul.f32 %v432, %v928
    %v993 = vmul.f32 %v437, %v929
    %v994 = vmul.f32 %v440, %v930
    %v995 = vmul.f32 %v445, %v931
    %v996 = vmul.f32 %v448, %v932
    %v997 = vmul.f32 %v453, %v933
    %v998 = vmul.f32 %v456, %v934
    %v999 = vmul.f32 %v461, %v935
    %v1000 = vmul.f32 %v464, %v936
    %v1001 = vmul.f32 %v469, %v937
    %v1002 = vmul.f32 %v472, %v938
    %v1003 = vmul.f32 %v477, %v939
    %v1004 = vmul.f32 %v480, %v940
    %v1005 = vmul.f32 %v485, %v941
    %v1006 = vmul.f32 %v488, %v942
    %v1007 = vmul.f32 %v493, %v943
    %v1008 = vmul.f32 %v496, %v944
    %v1009 = vmul.f32 %v501, %v945
    %v1010 = vmul.f32 %v504, %v946
    %v1011 = vmul.f32 %v509, %v947
    %v1012 = vmul.f32 %v512, %v948
    %v1013 = vmul.f32 %v517, %v949
    %v1014 = vmul.f32 %v520, %v950
    %v1015 = vmul.f32 %v525, %v951
    %v1016 = vmul.f32 %v528, %v952
    %v1017 = vmul.f32 %v533, %v953
    %v1018 = vmul.f32 %v536, %v954
    %v1019 = vmul.f32 %v541, %v955
    %v1020 = vmul.f32 %v544, %v956
    %v1021 = vmul.f32 %v549, %v957
    %v1022 = vmul.f32 %v552, %v958
    %v1023 = vmul.f32 %v557, %v959
    %v1024 = vmul.f32 %v560, %v960
    %v1025 = vmul.f32 %v565, %v961
    %v1026 = vmul.f32 %v568, %v962
    %v1027 = vmul.f32 %v573, %v963
    %v1028 = vmul.f32 %v576, %v964
    %v1029 = vmul.f32 %v581, %v965
    %v1030 = vmul.f32 %v584, %v966
    %v1031 = vmul.f32 %v589, %v967
    %v1032 = vmul.f32 %v592, %v968
    %v1033 = vmul.f32 %v597, %v969
    %v1034 = vmul.f32 %v600, %v970
    %v1035 = vmul.f32 %v605, %v971
    %v1036 = vmul.f32 %v608, %v972
    %v1037 = vmul.f32 %v613, %v973
    %v1038 = vmul.f32 %v616, %v974
    %v1039 = vmul.f32 %v621, %v975
    %v1040 = vmul.f32 %v624, %v976
    %v1041 = vmul.f32 %v629, %v977
    %v1042 = vmul.f32 %v632, %v978
    %v1043 = vmul.f32 %v637, %v979
    %v1044 = vmul.f32 %v640, %v980
    %v1045 = vmul.f32 %v645, %v981
    %v1046 = vmul.f32 %v648, %v982
    %v1047 = vmul.f32 %v653, %v983
    %v1048 = vmul.f32 %v656, %v984
    %v1049 = vmul.f32 %v661, %v985
    %v1050 = vmul.f32 %v664, %v986
    %v1051 = vpack.c.bf16 %v988, %v987
    %v1052 = vpack.c.bf16 %v990, %v989
    %v1053 = vpack.c.bf16 %v992, %v991
    %v1054 = vpack.c.bf16 %v994, %v993
    %v1055 = vpack.c.bf16 %v996, %v995
    %v1056 = vpack.c.bf16 %v998, %v997
    %v1057 = vpack.c.bf16 %v1000, %v999
    %v1058 = vpack.c.bf16 %v1002, %v1001
    %v1059 = vpack.c.bf16 %v1004, %v1003
    %v1060 = vpack.c.bf16 %v1006, %v1005
    %v1061 = vpack.c.bf16 %v1008, %v1007
    %v1062 = vpack.c.bf16 %v1010, %v1009
    %v1063 = vpack.c.bf16 %v1012, %v1011
    %v1064 = vpack.c.bf16 %v1014, %v1013
    %v1065 = vpack.c.bf16 %v1016, %v1015
    %v1066 = vpack.c.bf16 %v1018, %v1017
    %v1067 = vpack.c.bf16 %v1020, %v1019
    %v1068 = vpack.c.bf16 %v1022, %v1021
    %v1069 = vpack.c.bf16 %v1024, %v1023
    %v1070 = vpack.c.bf16 %v1026, %v1025
    %v1071 = vpack.c.bf16 %v1028, %v1027
    %v1072 = vpack.c.bf16 %v1030, %v1029
    %v1073 = vpack.c.bf16 %v1032, %v1031
    %v1074 = vpack.c.bf16 %v1034, %v1033
    %v1075 = vpack.c.bf16 %v1036, %v1035
    %v1076 = vpack.c.bf16 %v1038, %v1037
    %v1077 = vpack.c.bf16 %v1040, %v1039
    %v1078 = vpack.c.bf16 %v1042, %v1041
    %v1079 = vpack.c.bf16 %v1044, %v1043
    %v1080 = vpack.c.bf16 %v1046, %v1045
    %v1081 = vpack.c.bf16 %v1048, %v1047
    %v1082 = vpack.c.bf16 %v1050, %v1049
    %v1083 = vld [vmem:[%s3] sm:$0xf]
    %v1084 = vld [vmem:[%s3 + $0x4] sm:$0xf]
    %v1085 = vld [vmem:[%s3 + $0x8] sm:$0xf]
    %v1086 = vld [vmem:[%s3 + $0xc] sm:$0xf]
    %v1087 = vld [vmem:[%s4] sm:$0x1]
    %v1089 = vlaneseq
    %v1090 = vshrl.u32 %v1089, 7
    %v1091 = vsub.s32 0, %v1090
    %v1092 = vrot.slane %v1087, %v1091
    %v1098 = vunpack.c.l.b16 %v1083
    %v1099 = vunpack.c.l.b16 %v1084
    %v1100 = vunpack.c.l.b16 %v1085
    %v1101 = vunpack.c.l.b16 %v1086
    %v1102 = vpack.c.b16 %v1099, %v1098
    %v1103 = vpack.c.b16 %v1101, %v1100
    %vm1106 = vcmask 261120
    %v1108 = vsel %vm1106, %v1051, 0
    %v1111 = vsel %vm1106, %v1052, 0
    %v1114 = vsel %vm1106, %v1053, 0
    %v1117 = vsel %vm1106, %v1054, 0
    %v1120 = vsel %vm1106, %v1055, 0
    %v1123 = vsel %vm1106, %v1056, 0
    %v1126 = vsel %vm1106, %v1057, 0
    %v1129 = vsel %vm1106, %v1058, 0
    %v1132 = vsel %vm1106, %v1059, 0
    %v1135 = vsel %vm1106, %v1060, 0
    %v1138 = vsel %vm1106, %v1061, 0
    %v1141 = vsel %vm1106, %v1062, 0
    %v1144 = vsel %vm1106, %v1063, 0
    %v1147 = vsel %vm1106, %v1064, 0
    %v1150 = vsel %vm1106, %v1065, 0
    %v1153 = vsel %vm1106, %v1066, 0
    %v1156 = vsel %vm1106, %v1067, 0
    %v1159 = vsel %vm1106, %v1068, 0
    %v1162 = vsel %vm1106, %v1069, 0
    %v1165 = vsel %vm1106, %v1070, 0
    %v1168 = vsel %vm1106, %v1071, 0
    %v1171 = vsel %vm1106, %v1072, 0
    %v1174 = vsel %vm1106, %v1073, 0
    %v1177 = vsel %vm1106, %v1074, 0
    %v1180 = vsel %vm1106, %v1075, 0
    %v1183 = vsel %vm1106, %v1076, 0
    %v1186 = vsel %vm1106, %v1077, 0
    %v1189 = vsel %vm1106, %v1078, 0
    %v1192 = vsel %vm1106, %v1079, 0
    %v1195 = vsel %vm1106, %v1080, 0
    %v1198 = vsel %vm1106, %v1081, 0
    %v1201 = vsel %vm1106, %v1082, 0
    %1203 = vmatprep.subr.bf16.mxu0 0
    %1204 = vmatpush1.bf16.msra.mxu0 %v1102
    %1205 = vmatprep.subr.bf16.mxu0 0
    %1206 = vmatpush1.bf16.msra.mxu0 %v1103
    %1207 = vmatprep.subr.bf16.mxu0 0
    %1208 = vmatpush1.bf16.msra.mxu0 0
    %1209 = vmatprep.subr.bf16.mxu0 0
    %1210 = vmatpush1.bf16.msra.mxu0 0
    %1211 = vmatprep.subr.bf16.mxu0 0
    %1212 = vmatpush1.bf16.msra.mxu0 0
    %1213 = vmatprep.subr.bf16.mxu0 0
    %1214 = vmatpush1.bf16.msra.mxu0 0
    %1215 = vmatprep.subr.bf16.mxu0 0
    %1216 = vmatpush1.bf16.msra.mxu0 0
    %1217 = vmatprep.subr.bf16.mxu0 0
    %1218 = vmatpush1.bf16.msra.mxu0 0
    %1219 = vmatprep.subr.bf16.mxu0 0
    %1220 = vmatpush1.bf16.msra.mxu0 0
    %1221 = vmatprep.subr.bf16.mxu0 0
    %1222 = vmatpush1.bf16.msra.mxu0 0
    %1223 = vmatprep.subr.bf16.mxu0 0
    %1224 = vmatpush1.bf16.msra.mxu0 0
    %1225 = vmatprep.subr.bf16.mxu0 0
    %1226 = vmatpush1.bf16.msra.mxu0 0
    %1227 = vmatprep.subr.bf16.mxu0 0
    %1228 = vmatpush1.bf16.msra.mxu0 0
    %1229 = vmatprep.subr.bf16.mxu0 0
    %1230 = vmatpush1.bf16.msra.mxu0 0
    %1231 = vmatprep.subr.bf16.mxu0 0
    %1232 = vmatpush1.bf16.msra.mxu0 0
    %1233 = vmatprep.subr.bf16.mxu0 0
    %1234 = vmatpush1.bf16.msra.mxu0 0
    %1235 = vmatprep.mubr.bf16.mxu0 0
    %1236 = vmatmul.mubr.bf16.gmra.mrb[0].mxu0 %v1108
    %v1237 = vpop.f32.mrb[0].mxu0
    %v1238 = vadd.f32 %v1092, %v1237
    %v1239 = vpop.f32.mrb[0].mxu0
    %v1240 = vpop.f32.mrb[0].mxu0
    %v1241 = vadd.f32 %v1092, %v1240
    %v1242 = vpop.f32.mrb[0].mxu0
    %1243 = vmatprep.mubr.bf16.mxu0 0
    %1244 = vmatmul.mubr.bf16.gmra.mrb[0].mxu0 %v1111
    %v1245 = vpop.f32.mrb[0].mxu0
    %v1246 = vadd.f32 %v1092, %v1245
    %v1247 = vpop.f32.mrb[0].mxu0
    %v1248 = vpop.f32.mrb[0].mxu0
    %v1249 = vadd.f32 %v1092, %v1248
    %v1250 = vpop.f32.mrb[0].mxu0
    %1251 = vmatprep.mubr.bf16.mxu0 0
    %1252 = vmatmul.mubr.bf16.gmra.mrb[0].mxu0 %v1114
    %v1253 = vpop.f32.mrb[0].mxu0
    %v1254 = vadd.f32 %v1092, %v1253
    %v1255 = vpop.f32.mrb[0].mxu0
    %v1256 = vpop.f32.mrb[0].mxu0
    %v1257 = vadd.f32 %v1092, %v1256
    %v1258 = vpop.f32.mrb[0].mxu0
    %1259 = vmatprep.mubr.bf16.mxu0 0
    %1260 = vmatmul.mubr.bf16.gmra.mrb[0].mxu0 %v1117
    %v1261 = vpop.f32.mrb[0].mxu0
    %v1262 = vadd.f32 %v1092, %v1261
    %v1263 = vpop.f32.mrb[0].mxu0
    %v1264 = vpop.f32.mrb[0].mxu0
    %v1265 = vadd.f32 %v1092, %v1264
    %v1266 = vpop.f32.mrb[0].mxu0
    %1267 = vmatprep.mubr.bf16.mxu0 0
    %1268 = vmatmul.mubr.bf16.gmra.mrb[0].mxu0 %v1120
    %v1269 = vpop.f32.mrb[0].mxu0
    %v1270 = vadd.f32 %v1092, %v1269
    %v1271 = vpop.f32.mrb[0].mxu0
    %v1272 = vpop.f32.mrb[0].mxu0
    %v1273 = vadd.f32 %v1092, %v1272
    %v1274 = vpop.f32.mrb[0].mxu0
    %1275 = vmatprep.mubr.bf16.mxu0 0
    %1276 = vmatmul.mubr.bf16.gmra.mrb[0].mxu0 %v1123
    %v1277 = vpop.f32.mrb[0].mxu0
    %v1278 = vadd.f32 %v1092, %v1277
    %v1279 = vpop.f32.mrb[0].mxu0
    %v1280 = vpop.f32.mrb[0].mxu0
    %v1281 = vadd.f32 %v1092, %v1280
    %v1282 = vpop.f32.mrb[0].mxu0
    %1283 = vmatprep.mubr.bf16.mxu0 0
    %1284 = vmatmul.mubr.bf16.gmra.mrb[0].mxu0 %v1126
    %v1285 = vpop.f32.mrb[0].mxu0
    %v1286 = vadd.f32 %v1092, %v1285
    %v1287 = vpop.f32.mrb[0].mxu0
    %v1288 = vpop.f32.mrb[0].mxu0
    %v1289 = vadd.f32 %v1092, %v1288
    %v1290 = vpop.f32.mrb[0].mxu0
    %1291 = vmatprep.mubr.bf16.mxu0 0
    %1292 = vmatmul.mubr.bf16.gmra.mrb[0].mxu0 %v1129
    %v1293 = vpop.f32.mrb[0].mxu0
    %v1294 = vadd.f32 %v1092, %v1293
    %v1295 = vpop.f32.mrb[0].mxu0
    %v1296 = vpop.f32.mrb[0].mxu0
    %v1297 = vadd.f32 %v1092, %v1296
    %v1298 = vpop.f32.mrb[0].mxu0
    %1299 = vmatprep.mubr.bf16.mxu0 0
    %1300 = vmatmul.mubr.bf16.gmra.mrb[0].mxu0 %v1132
    %v1301 = vpop.f32.mrb[0].mxu0
    %v1302 = vadd.f32 %v1092, %v1301
    %v1303 = vpop.f32.mrb[0].mxu0
    %v1304 = vpop.f32.mrb[0].mxu0
    %v1305 = vadd.f32 %v1092, %v1304
    %v1306 = vpop.f32.mrb[0].mxu0
    %1307 = vmatprep.mubr.bf16.mxu0 0
    %1308 = vmatmul.mubr.bf16.gmra.mrb[0].mxu0 %v1135
    %v1309 = vpop.f32.mrb[0].mxu0
    %v1310 = vadd.f32 %v1092, %v1309
    %v1311 = vpop.f32.mrb[0].mxu0
    %v1312 = vpop.f32.mrb[0].mxu0
    %v1313 = vadd.f32 %v1092, %v1312
    %v1314 = vpop.f32.mrb[0].mxu0
    %1315 = vmatprep.mubr.bf16.mxu0 0
    %1316 = vmatmul.mubr.bf16.gmra.mrb[0].mxu0 %v1138
    %v1317 = vpop.f32.mrb[0].mxu0
    %v1318 = vadd.f32 %v1092, %v1317
    %v1319 = vpop.f32.mrb[0].mxu0
    %v1320 = vpop.f32.mrb[0].mxu0
    %v1321 = vadd.f32 %v1092, %v1320
    %v1322 = vpop.f32.mrb[0].mxu0
    %1323 = vmatprep.mubr.bf16.mxu0 0
    %1324 = vmatmul.mubr.bf16.gmra.mrb[0].mxu0 %v1141
    %v1325 = vpop.f32.mrb[0].mxu0
    %v1326 = vadd.f32 %v1092, %v1325
    %v1327 = vpop.f32.mrb[0].mxu0
    %v1328 = vpop.f32.mrb[0].mxu0
    %v1329 = vadd.f32 %v1092, %v1328
    %v1330 = vpop.f32.mrb[0].mxu0
    %1331 = vmatprep.mubr.bf16.mxu0 0
    %1332 = vmatmul.mubr.bf16.gmra.mrb[0].mxu0 %v1144
    %v1333 = vpop.f32.mrb[0].mxu0
    %v1334 = vadd.f32 %v1092, %v1333
    %v1335 = vpop.f32.mrb[0].mxu0
    %v1336 = vpop.f32.mrb[0].mxu0
    %v1337 = vadd.f32 %v1092, %v1336
    %v1338 = vpop.f32.mrb[0].mxu0
    %1339 = vmatprep.mubr.bf16.mxu0 0
    %1340 = vmatmul.mubr.bf16.gmra.mrb[0].mxu0 %v1147
    %v1341 = vpop.f32.mrb[0].mxu0
    %v1342 = vadd.f32 %v1092, %v1341
    %v1343 = vpop.f32.mrb[0].mxu0
    %v1344 = vpop.f32.mrb[0].mxu0
    %v1345 = vadd.f32 %v1092, %v1344
    %v1346 = vpop.f32.mrb[0].mxu0
    %1347 = vmatprep.mubr.bf16.mxu0 0
    %1348 = vmatmul.mubr.bf16.gmra.mrb[0].mxu0 %v1150
    %v1349 = vpop.f32.mrb[0].mxu0
    %v1350 = vadd.f32 %v1092, %v1349
    %v1351 = vpop.f32.mrb[0].mxu0
    %v1352 = vpop.f32.mrb[0].mxu0
    %v1353 = vadd.f32 %v1092, %v1352
    %v1354 = vpop.f32.mrb[0].mxu0
    %1355 = vmatprep.mubr.bf16.mxu0 0
    %1356 = vmatmul.mubr.bf16.gmra.mrb[0].mxu0 %v1153
    %v1357 = vpop.f32.mrb[0].mxu0
    %v1358 = vadd.f32 %v1092, %v1357
    %v1359 = vpop.f32.mrb[0].mxu0
    %v1360 = vpop.f32.mrb[0].mxu0
    %v1361 = vadd.f32 %v1092, %v1360
    %v1362 = vpop.f32.mrb[0].mxu0
    %1363 = vmatprep.mubr.bf16.mxu0 0
    %1364 = vmatmul.mubr.bf16.gmra.mrb[0].mxu0 %v1156
    %v1365 = vpop.f32.mrb[0].mxu0
    %v1366 = vadd.f32 %v1092, %v1365
    %v1367 = vpop.f32.mrb[0].mxu0
    %v1368 = vpop.f32.mrb[0].mxu0
    %v1369 = vadd.f32 %v1092, %v1368
    %v1370 = vpop.f32.mrb[0].mxu0
    %1371 = vmatprep.mubr.bf16.mxu0 0
    %1372 = vmatmul.mubr.bf16.gmra.mrb[0].mxu0 %v1159
    %v1373 = vpop.f32.mrb[0].mxu0
    %v1374 = vadd.f32 %v1092, %v1373
    %v1375 = vpop.f32.mrb[0].mxu0
    %v1376 = vpop.f32.mrb[0].mxu0
    %v1377 = vadd.f32 %v1092, %v1376
    %v1378 = vpop.f32.mrb[0].mxu0
    %1379 = vmatprep.mubr.bf16.mxu0 0
    %1380 = vmatmul.mubr.bf16.gmra.mrb[0].mxu0 %v1162
    %v1381 = vpop.f32.mrb[0].mxu0
    %v1382 = vadd.f32 %v1092, %v1381
    %v1383 = vpop.f32.mrb[0].mxu0
    %v1384 = vpop.f32.mrb[0].mxu0
    %v1385 = vadd.f32 %v1092, %v1384
    %v1386 = vpop.f32.mrb[0].mxu0
    %1387 = vmatprep.mubr.bf16.mxu0 0
    %1388 = vmatmul.mubr.bf16.gmra.mrb[0].mxu0 %v1165
    %v1389 = vpop.f32.mrb[0].mxu0
    %v1390 = vadd.f32 %v1092, %v1389
    %v1391 = vpop.f32.mrb[0].mxu0
    %v1392 = vpop.f32.mrb[0].mxu0
    %v1393 = vadd.f32 %v1092, %v1392
    %v1394 = vpop.f32.mrb[0].mxu0
    %1395 = vmatprep.mubr.bf16.mxu0 0
    %1396 = vmatmul.mubr.bf16.gmra.mrb[0].mxu0 %v1168
    %v1397 = vpop.f32.mrb[0].mxu0
    %v1398 = vadd.f32 %v1092, %v1397
    %v1399 = vpop.f32.mrb[0].mxu0
    %v1400 = vpop.f32.mrb[0].mxu0
    %v1401 = vadd.f32 %v1092, %v1400
    %v1402 = vpop.f32.mrb[0].mxu0
    %1403 = vmatprep.mubr.bf16.mxu0 0
    %1404 = vmatmul.mubr.bf16.gmra.mrb[0].mxu0 %v1171
    %v1405 = vpop.f32.mrb[0].mxu0
    %v1406 = vadd.f32 %v1092, %v1405
    %v1407 = vpop.f32.mrb[0].mxu0
    %v1408 = vpop.f32.mrb[0].mxu0
    %v1409 = vadd.f32 %v1092, %v1408
    %v1410 = vpop.f32.mrb[0].mxu0
    %1411 = vmatprep.mubr.bf16.mxu0 0
    %1412 = vmatmul.mubr.bf16.gmra.mrb[0].mxu0 %v1174
    %v1413 = vpop.f32.mrb[0].mxu0
    %v1414 = vadd.f32 %v1092, %v1413
    %v1415 = vpop.f32.mrb[0].mxu0
    %v1416 = vpop.f32.mrb[0].mxu0
    %v1417 = vadd.f32 %v1092, %v1416
    %v1418 = vpop.f32.mrb[0].mxu0
    %1419 = vmatprep.mubr.bf16.mxu0 0
    %1420 = vmatmul.mubr.bf16.gmra.mrb[0].mxu0 %v1177
    %v1421 = vpop.f32.mrb[0].mxu0
    %v1422 = vadd.f32 %v1092, %v1421
    %v1423 = vpop.f32.mrb[0].mxu0
    %v1424 = vpop.f32.mrb[0].mxu0
    %v1425 = vadd.f32 %v1092, %v1424
    %v1426 = vpop.f32.mrb[0].mxu0
    %1427 = vmatprep.mubr.bf16.mxu0 0
    %1428 = vmatmul.mubr.bf16.gmra.mrb[0].mxu0 %v1180
    %v1429 = vpop.f32.mrb[0].mxu0
    %v1430 = vadd.f32 %v1092, %v1429
    %v1431 = vpop.f32.mrb[0].mxu0
    %v1432 = vpop.f32.mrb[0].mxu0
    %v1433 = vadd.f32 %v1092, %v1432
    %v1434 = vpop.f32.mrb[0].mxu0
    %1435 = vmatprep.mubr.bf16.mxu0 0
    %1436 = vmatmul.mubr.bf16.gmra.mrb[0].mxu0 %v1183
    %v1437 = vpop.f32.mrb[0].mxu0
    %v1438 = vadd.f32 %v1092, %v1437
    %v1439 = vpop.f32.mrb[0].mxu0
    %v1440 = vpop.f32.mrb[0].mxu0
    %v1441 = vadd.f32 %v1092, %v1440
    %v1442 = vpop.f32.mrb[0].mxu0
    %1443 = vmatprep.mubr.bf16.mxu0 0
    %1444 = vmatmul.mubr.bf16.gmra.mrb[0].mxu0 %v1186
    %v1445 = vpop.f32.mrb[0].mxu0
    %v1446 = vadd.f32 %v1092, %v1445
    %v1447 = vpop.f32.mrb[0].mxu0
    %v1448 = vpop.f32.mrb[0].mxu0
    %v1449 = vadd.f32 %v1092, %v1448
    %v1450 = vpop.f32.mrb[0].mxu0
    %1451 = vmatprep.mubr.bf16.mxu0 0
    %1452 = vmatmul.mubr.bf16.gmra.mrb[0].mxu0 %v1189
    %v1453 = vpop.f32.mrb[0].mxu0
    %v1454 = vadd.f32 %v1092, %v1453
    %v1455 = vpop.f32.mrb[0].mxu0
    %v1456 = vpop.f32.mrb[0].mxu0
    %v1457 = vadd.f32 %v1092, %v1456
    %v1458 = vpop.f32.mrb[0].mxu0
    %1459 = vmatprep.mubr.bf16.mxu0 0
    %1460 = vmatmul.mubr.bf16.gmra.mrb[0].mxu0 %v1192
    %v1461 = vpop.f32.mrb[0].mxu0
    %v1462 = vadd.f32 %v1092, %v1461
    %v1463 = vpop.f32.mrb[0].mxu0
    %v1464 = vpop.f32.mrb[0].mxu0
    %v1465 = vadd.f32 %v1092, %v1464
    %v1466 = vpop.f32.mrb[0].mxu0
    %1467 = vmatprep.mubr.bf16.mxu0 0
    %1468 = vmatmul.mubr.bf16.gmra.mrb[0].mxu0 %v1195
    %v1469 = vpop.f32.mrb[0].mxu0
    %v1470 = vadd.f32 %v1092, %v1469
    %v1471 = vpop.f32.mrb[0].mxu0
    %v1472 = vpop.f32.mrb[0].mxu0
    %v1473 = vadd.f32 %v1092, %v1472
    %v1474 = vpop.f32.mrb[0].mxu0
    %1475 = vmatprep.mubr.bf16.mxu0 0
    %1476 = vmatmul.mubr.bf16.gmra.mrb[0].mxu0 %v1198
    %v1477 = vpop.f32.mrb[0].mxu0
    %v1478 = vadd.f32 %v1092, %v1477
    %v1479 = vpop.f32.mrb[0].mxu0
    %v1480 = vpop.f32.mrb[0].mxu0
    %v1481 = vadd.f32 %v1092, %v1480
    %v1482 = vpop.f32.mrb[0].mxu0
    %1483 = vmatprep.mubr.bf16.mxu0 0
    %1484 = vmatmul.mubr.bf16.gmra.mrb[0].mxu0 %v1201
    %v1485 = vpop.f32.mrb[0].mxu0
    %v1486 = vadd.f32 %v1092, %v1485
    %v1487 = vpop.f32.mrb[0].mxu0
    %v1488 = vpop.f32.mrb[0].mxu0
    %v1489 = vadd.f32 %v1092, %v1488
    %v1490 = vpop.f32.mrb[0].mxu0
    %1491 = vdwg.mxu0
    %v1492 = vpack.c.bf16 %v1241, %v1238
    %v1493 = vpack.c.bf16 %v1249, %v1246
    %v1494 = vpack.c.bf16 %v1257, %v1254
    %v1495 = vpack.c.bf16 %v1265, %v1262
    %v1496 = vpack.c.bf16 %v1273, %v1270
    %v1497 = vpack.c.bf16 %v1281, %v1278
    %v1498 = vpack.c.bf16 %v1289, %v1286
    %v1499 = vpack.c.bf16 %v1297, %v1294
    %v1500 = vpack.c.bf16 %v1305, %v1302
    %v1501 = vpack.c.bf16 %v1313, %v1310
    %v1502 = vpack.c.bf16 %v1321, %v1318
    %v1503 = vpack.c.bf16 %v1329, %v1326
    %v1504 = vpack.c.bf16 %v1337, %v1334
    %v1505 = vpack.c.bf16 %v1345, %v1342
    %v1506 = vpack.c.bf16 %v1353, %v1350
    %v1507 = vpack.c.bf16 %v1361, %v1358
    %v1508 = vpack.c.bf16 %v1369, %v1366
    %v1509 = vpack.c.bf16 %v1377, %v1374
    %v1510 = vpack.c.bf16 %v1385, %v1382
    %v1511 = vpack.c.bf16 %v1393, %v1390
    %v1512 = vpack.c.bf16 %v1401, %v1398
    %v1513 = vpack.c.bf16 %v1409, %v1406
    %v1514 = vpack.c.bf16 %v1417, %v1414
    %v1515 = vpack.c.bf16 %v1425, %v1422
    %v1516 = vpack.c.bf16 %v1433, %v1430
    %v1517 = vpack.c.bf16 %v1441, %v1438
    %v1518 = vpack.c.bf16 %v1449, %v1446
    %v1519 = vpack.c.bf16 %v1457, %v1454
    %v1520 = vpack.c.bf16 %v1465, %v1462
    %v1521 = vpack.c.bf16 %v1473, %v1470
    %v1522 = vpack.c.bf16 %v1481, %v1478
    %v1523 = vpack.c.bf16 %v1489, %v1486
    %v1524 = vxor.u32 %v1492, 2147516416
    %v1525 = vxor.u32 %v1493, 2147516416
    %v1526 = vxor.u32 %v1494, 2147516416
    %v1527 = vxor.u32 %v1495, 2147516416
    %v1528 = vxor.u32 %v1496, 2147516416
    %v1529 = vxor.u32 %v1497, 2147516416
    %v1530 = vxor.u32 %v1498, 2147516416
    %v1531 = vxor.u32 %v1499, 2147516416
    %v1532 = vxor.u32 %v1500, 2147516416
    %v1533 = vxor.u32 %v1501, 2147516416
    %v1534 = vxor.u32 %v1502, 2147516416
    %v1535 = vxor.u32 %v1503, 2147516416
    %v1536 = vxor.u32 %v1504, 2147516416
    %v1537 = vxor.u32 %v1505, 2147516416
    %v1538 = vxor.u32 %v1506, 2147516416
    %v1539 = vxor.u32 %v1507, 2147516416
    %v1540 = vxor.u32 %v1508, 2147516416
    %v1541 = vxor.u32 %v1509, 2147516416
    %v1542 = vxor.u32 %v1510, 2147516416
    %v1543 = vxor.u32 %v1511, 2147516416
    %v1544 = vxor.u32 %v1512, 2147516416
    %v1545 = vxor.u32 %v1513, 2147516416
    %v1546 = vxor.u32 %v1514, 2147516416
    %v1547 = vxor.u32 %v1515, 2147516416
    %v1548 = vxor.u32 %v1516, 2147516416
    %v1549 = vxor.u32 %v1517, 2147516416
    %v1550 = vxor.u32 %v1518, 2147516416
    %v1551 = vxor.u32 %v1519, 2147516416
    %v1552 = vxor.u32 %v1520, 2147516416
    %v1553 = vxor.u32 %v1521, 2147516416
    %v1554 = vxor.u32 %v1522, 2147516416
    %v1555 = vxor.u32 %v1523, 2147516416
    %v1557 = vmul.bf16 %v1524, 1069105081
    %v1558 = vpow.bf16.pop %v1557
    %v1560 = vmul.bf16 %v1525, 1069105081
    %v1561 = vpow.bf16.pop %v1560
    %v1563 = vmul.bf16 %v1526, 1069105081
    %v1564 = vpow.bf16.pop %v1563
    %v1566 = vmul.bf16 %v1527, 1069105081
    %v1567 = vpow.bf16.pop %v1566
    %v1569 = vmul.bf16 %v1528, 1069105081
    %v1570 = vpow.bf16.pop %v1569
    %v1572 = vmul.bf16 %v1529, 1069105081
    %v1573 = vpow.bf16.pop %v1572
    %v1575 = vmul.bf16 %v1530, 1069105081
    %v1576 = vpow.bf16.pop %v1575
    %v1578 = vmul.bf16 %v1531, 1069105081
    %v1579 = vpow.bf16.pop %v1578
    %v1581 = vmul.bf16 %v1532, 1069105081
    %v1582 = vpow.bf16.pop %v1581
    %v1584 = vmul.bf16 %v1533, 1069105081
    %v1585 = vpow.bf16.pop %v1584
    %v1587 = vmul.bf16 %v1534, 1069105081
    %v1588 = vpow.bf16.pop %v1587
    %v1590 = vmul.bf16 %v1535, 1069105081
    %v1591 = vpow.bf16.pop %v1590
    %v1593 = vmul.bf16 %v1536, 1069105081
    %v1594 = vpow.bf16.pop %v1593
    %v1596 = vmul.bf16 %v1537, 1069105081
    %v1597 = vpow.bf16.pop %v1596
    %v1599 = vmul.bf16 %v1538, 1069105081
    %v1600 = vpow.bf16.pop %v1599
    %v1602 = vmul.bf16 %v1539, 1069105081
    %v1603 = vpow.bf16.pop %v1602
    %v1605 = vmul.bf16 %v1540, 1069105081
    %v1606 = vpow.bf16.pop %v1605
    %v1608 = vmul.bf16 %v1541, 1069105081
    %v1609 = vpow.bf16.pop %v1608
    %v1611 = vmul.bf16 %v1542, 1069105081
    %v1612 = vpow.bf16.pop %v1611
    %v1614 = vmul.bf16 %v1543, 1069105081
    %v1615 = vpow.bf16.pop %v1614
    %v1617 = vmul.bf16 %v1544, 1069105081
    %v1618 = vpow.bf16.pop %v1617
    %v1620 = vmul.bf16 %v1545, 1069105081
    %v1621 = vpow.bf16.pop %v1620
    %v1623 = vmul.bf16 %v1546, 1069105081
    %v1624 = vpow.bf16.pop %v1623
    %v1626 = vmul.bf16 %v1547, 1069105081
    %v1627 = vpow.bf16.pop %v1626
    %v1629 = vmul.bf16 %v1548, 1069105081
    %v1630 = vpow.bf16.pop %v1629
    %v1632 = vmul.bf16 %v1549, 1069105081
    %v1633 = vpow.bf16.pop %v1632
    %v1635 = vmul.bf16 %v1550, 1069105081
    %v1636 = vpow.bf16.pop %v1635
    %v1638 = vmul.bf16 %v1551, 1069105081
    %v1639 = vpow.bf16.pop %v1638
    %v1641 = vmul.bf16 %v1552, 1069105081
    %v1642 = vpow.bf16.pop %v1641
    %v1644 = vmul.bf16 %v1553, 1069105081
    %v1645 = vpow.bf16.pop %v1644
    %v1647 = vmul.bf16 %v1554, 1069105081
    %v1648 = vpow.bf16.pop %v1647
    %v1650 = vmul.bf16 %v1555, 1069105081
    %v1651 = vpow.bf16.pop %v1650
    %v1652 = vadd.bf16 %v1558, 1065369472
    %v1653 = vadd.bf16 %v1561, 1065369472
    %v1654 = vadd.bf16 %v1564, 1065369472
    %v1655 = vadd.bf16 %v1567, 1065369472
    %v1656 = vadd.bf16 %v1570, 1065369472
    %v1657 = vadd.bf16 %v1573, 1065369472
    %v1658 = vadd.bf16 %v1576, 1065369472
    %v1659 = vadd.bf16 %v1579, 1065369472
    %v1660 = vadd.bf16 %v1582, 1065369472
    %v1661 = vadd.bf16 %v1585, 1065369472
    %v1662 = vadd.bf16 %v1588, 1065369472
    %v1663 = vadd.bf16 %v1591, 1065369472
    %v1664 = vadd.bf16 %v1594, 1065369472
    %v1665 = vadd.bf16 %v1597, 1065369472
    %v1666 = vadd.bf16 %v1600, 1065369472
    %v1667 = vadd.bf16 %v1603, 1065369472
    %v1668 = vadd.bf16 %v1606, 1065369472
    %v1669 = vadd.bf16 %v1609, 1065369472
    %v1670 = vadd.bf16 %v1612, 1065369472
    %v1671 = vadd.bf16 %v1615, 1065369472
    %v1672 = vadd.bf16 %v1618, 1065369472
    %v1673 = vadd.bf16 %v1621, 1065369472
    %v1674 = vadd.bf16 %v1624, 1065369472
    %v1675 = vadd.bf16 %v1627, 1065369472
    %v1676 = vadd.bf16 %v1630, 1065369472
    %v1677 = vadd.bf16 %v1633, 1065369472
    %v1678 = vadd.bf16 %v1636, 1065369472
    %v1679 = vadd.bf16 %v1639, 1065369472
    %v1680 = vadd.bf16 %v1642, 1065369472
    %v1681 = vadd.bf16 %v1645, 1065369472
    %v1682 = vadd.bf16 %v1648, 1065369472
    %v1683 = vadd.bf16 %v1651, 1065369472
    %v1684 = vrcp.bf16.pop %v1652
    %v1685 = vmul.bf16 1065369472, %v1684
    %v1686 = vrcp.bf16.pop %v1653
    %v1687 = vmul.bf16 1065369472, %v1686
    %v1688 = vrcp.bf16.pop %v1654
    %v1689 = vmul.bf16 1065369472, %v1688
    %v1690 = vrcp.bf16.pop %v1655
    %v1691 = vmul.bf16 1065369472, %v1690
    %v1692 = vrcp.bf16.pop %v1656
    %v1693 = vmul.bf16 1065369472, %v1692
    %v1694 = vrcp.bf16.pop %v1657
    %v1695 = vmul.bf16 1065369472, %v1694
    %v1696 = vrcp.bf16.pop %v1658
    %v1697 = vmul.bf16 1065369472, %v1696
    %v1698 = vrcp.bf16.pop %v1659
    %v1699 = vmul.bf16 1065369472, %v1698
    %v1700 = vrcp.bf16.pop %v1660
    %v1701 = vmul.bf16 1065369472, %v1700
    %v1702 = vrcp.bf16.pop %v1661
    %v1703 = vmul.bf16 1065369472, %v1702
    %v1704 = vrcp.bf16.pop %v1662
    %v1705 = vmul.bf16 1065369472, %v1704
    %v1706 = vrcp.bf16.pop %v1663
    %v1707 = vmul.bf16 1065369472, %v1706
    %v1708 = vrcp.bf16.pop %v1664
    %v1709 = vmul.bf16 1065369472, %v1708
    %v1710 = vrcp.bf16.pop %v1665
    %v1711 = vmul.bf16 1065369472, %v1710
    %v1712 = vrcp.bf16.pop %v1666
    %v1713 = vmul.bf16 1065369472, %v1712
    %v1714 = vrcp.bf16.pop %v1667
    %v1715 = vmul.bf16 1065369472, %v1714
    %v1716 = vrcp.bf16.pop %v1668
    %v1717 = vmul.bf16 1065369472, %v1716
    %v1718 = vrcp.bf16.pop %v1669
    %v1719 = vmul.bf16 1065369472, %v1718
    %v1720 = vrcp.bf16.pop %v1670
    %v1721 = vmul.bf16 1065369472, %v1720
    %v1722 = vrcp.bf16.pop %v1671
    %v1723 = vmul.bf16 1065369472, %v1722
    %v1724 = vrcp.bf16.pop %v1672
    %v1725 = vmul.bf16 1065369472, %v1724
    %v1726 = vrcp.bf16.pop %v1673
    %v1727 = vmul.bf16 1065369472, %v1726
    %v1728 = vrcp.bf16.pop %v1674
    %v1729 = vmul.bf16 1065369472, %v1728
    %v1730 = vrcp.bf16.pop %v1675
    %v1731 = vmul.bf16 1065369472, %v1730
    %v1732 = vrcp.bf16.pop %v1676
    %v1733 = vmul.bf16 1065369472, %v1732
    %v1734 = vrcp.bf16.pop %v1677
    %v1735 = vmul.bf16 1065369472, %v1734
    %v1736 = vrcp.bf16.pop %v1678
    %v1737 = vmul.bf16 1065369472, %v1736
    %v1738 = vrcp.bf16.pop %v1679
    %v1739 = vmul.bf16 1065369472, %v1738
    %v1740 = vrcp.bf16.pop %v1680
    %v1741 = vmul.bf16 1065369472, %v1740
    %v1742 = vrcp.bf16.pop %v1681
    %v1743 = vmul.bf16 1065369472, %v1742
    %v1744 = vrcp.bf16.pop %v1682
    %v1745 = vmul.bf16 1065369472, %v1744
    %v1746 = vrcp.bf16.pop %v1683
    %v1747 = vmul.bf16 1065369472, %v1746
    %v1748 = vunpack.c.l.bf16 %v1685
    %v1749 = vunpack.c.h.bf16 %v1685
    %v1750 = vunpack.c.l.bf16 %v1687
    %v1751 = vunpack.c.h.bf16 %v1687
    %v1752 = vunpack.c.l.bf16 %v1689
    %v1753 = vunpack.c.h.bf16 %v1689
    %v1754 = vunpack.c.l.bf16 %v1691
    %v1755 = vunpack.c.h.bf16 %v1691
    %v1756 = vunpack.c.l.bf16 %v1693
    %v1757 = vunpack.c.h.bf16 %v1693
    %v1758 = vunpack.c.l.bf16 %v1695
    %v1759 = vunpack.c.h.bf16 %v1695
    %v1760 = vunpack.c.l.bf16 %v1697
    %v1761 = vunpack.c.h.bf16 %v1697
    %v1762 = vunpack.c.l.bf16 %v1699
    %v1763 = vunpack.c.h.bf16 %v1699
    %v1764 = vunpack.c.l.bf16 %v1701
    %v1765 = vunpack.c.h.bf16 %v1701
    %v1766 = vunpack.c.l.bf16 %v1703
    %v1767 = vunpack.c.h.bf16 %v1703
    %v1768 = vunpack.c.l.bf16 %v1705
    %v1769 = vunpack.c.h.bf16 %v1705
    %v1770 = vunpack.c.l.bf16 %v1707
    %v1771 = vunpack.c.h.bf16 %v1707
    %v1772 = vunpack.c.l.bf16 %v1709
    %v1773 = vunpack.c.h.bf16 %v1709
    %v1774 = vunpack.c.l.bf16 %v1711
    %v1775 = vunpack.c.h.bf16 %v1711
    %v1776 = vunpack.c.l.bf16 %v1713
    %v1777 = vunpack.c.h.bf16 %v1713
    %v1778 = vunpack.c.l.bf16 %v1715
    %v1779 = vunpack.c.h.bf16 %v1715
    %v1780 = vunpack.c.l.bf16 %v1717
    %v1781 = vunpack.c.h.bf16 %v1717
    %v1782 = vunpack.c.l.bf16 %v1719
    %v1783 = vunpack.c.h.bf16 %v1719
    %v1784 = vunpack.c.l.bf16 %v1721
    %v1785 = vunpack.c.h.bf16 %v1721
    %v1786 = vunpack.c.l.bf16 %v1723
    %v1787 = vunpack.c.h.bf16 %v1723
    %v1788 = vunpack.c.l.bf16 %v1725
    %v1789 = vunpack.c.h.bf16 %v1725
    %v1790 = vunpack.c.l.bf16 %v1727
    %v1791 = vunpack.c.h.bf16 %v1727
    %v1792 = vunpack.c.l.bf16 %v1729
    %v1793 = vunpack.c.h.bf16 %v1729
    %v1794 = vunpack.c.l.bf16 %v1731
    %v1795 = vunpack.c.h.bf16 %v1731
    %v1796 = vunpack.c.l.bf16 %v1733
    %v1797 = vunpack.c.h.bf16 %v1733
    %v1798 = vunpack.c.l.bf16 %v1735
    %v1799 = vunpack.c.h.bf16 %v1735
    %v1800 = vunpack.c.l.bf16 %v1737
    %v1801 = vunpack.c.h.bf16 %v1737
    %v1802 = vunpack.c.l.bf16 %v1739
    %v1803 = vunpack.c.h.bf16 %v1739
    %v1804 = vunpack.c.l.bf16 %v1741
    %v1805 = vunpack.c.h.bf16 %v1741
    %v1806 = vunpack.c.l.bf16 %v1743
    %v1807 = vunpack.c.h.bf16 %v1743
    %v1808 = vunpack.c.l.bf16 %v1745
    %v1809 = vunpack.c.h.bf16 %v1745
    %v1810 = vunpack.c.l.bf16 %v1747
    %v1811 = vunpack.c.h.bf16 %v1747
    %v1812 = vmul.f32 %v1238, %v1748
    %v1813 = vmul.f32 %v1241, %v1749
    %v1814 = vmul.f32 %v1246, %v1750
    %v1815 = vmul.f32 %v1249, %v1751
    %v1816 = vmul.f32 %v1254, %v1752
    %v1817 = vmul.f32 %v1257, %v1753
    %v1818 = vmul.f32 %v1262, %v1754
    %v1819 = vmul.f32 %v1265, %v1755
    %v1820 = vmul.f32 %v1270, %v1756
    %v1821 = vmul.f32 %v1273, %v1757
    %v1822 = vmul.f32 %v1278, %v1758
    %v1823 = vmul.f32 %v1281, %v1759
    %v1824 = vmul.f32 %v1286, %v1760
    %v1825 = vmul.f32 %v1289, %v1761
    %v1826 = vmul.f32 %v1294, %v1762
    %v1827 = vmul.f32 %v1297, %v1763
    %v1828 = vmul.f32 %v1302, %v1764
    %v1829 = vmul.f32 %v1305, %v1765
    %v1830 = vmul.f32 %v1310, %v1766
    %v1831 = vmul.f32 %v1313, %v1767
    %v1832 = vmul.f32 %v1318, %v1768
    %v1833 = vmul.f32 %v1321, %v1769
    %v1834 = vmul.f32 %v1326, %v1770
    %v1835 = vmul.f32 %v1329, %v1771
    %v1836 = vmul.f32 %v1334, %v1772
    %v1837 = vmul.f32 %v1337, %v1773
    %v1838 = vmul.f32 %v1342, %v1774
    %v1839 = vmul.f32 %v1345, %v1775
    %v1840 = vmul.f32 %v1350, %v1776
    %v1841 = vmul.f32 %v1353, %v1777
    %v1842 = vmul.f32 %v1358, %v1778
    %v1843 = vmul.f32 %v1361, %v1779
    %v1844 = vmul.f32 %v1366, %v1780
    %v1845 = vmul.f32 %v1369, %v1781
    %v1846 = vmul.f32 %v1374, %v1782
    %v1847 = vmul.f32 %v1377, %v1783
    %v1848 = vmul.f32 %v1382, %v1784
    %v1849 = vmul.f32 %v1385, %v1785
    %v1850 = vmul.f32 %v1390, %v1786
    %v1851 = vmul.f32 %v1393, %v1787
    %v1852 = vmul.f32 %v1398, %v1788
    %v1853 = vmul.f32 %v1401, %v1789
    %v1854 = vmul.f32 %v1406, %v1790
    %v1855 = vmul.f32 %v1409, %v1791
    %v1856 = vmul.f32 %v1414, %v1792
    %v1857 = vmul.f32 %v1417, %v1793
    %v1858 = vmul.f32 %v1422, %v1794
    %v1859 = vmul.f32 %v1425, %v1795
    %v1860 = vmul.f32 %v1430, %v1796
    %v1861 = vmul.f32 %v1433, %v1797
    %v1862 = vmul.f32 %v1438, %v1798
    %v1863 = vmul.f32 %v1441, %v1799
    %v1864 = vmul.f32 %v1446, %v1800
    %v1865 = vmul.f32 %v1449, %v1801
    %v1866 = vmul.f32 %v1454, %v1802
    %v1867 = vmul.f32 %v1457, %v1803
    %v1868 = vmul.f32 %v1462, %v1804
    %v1869 = vmul.f32 %v1465, %v1805
    %v1870 = vmul.f32 %v1470, %v1806
    %v1871 = vmul.f32 %v1473, %v1807
    %v1872 = vmul.f32 %v1478, %v1808
    %v1873 = vmul.f32 %v1481, %v1809
    %v1874 = vmul.f32 %v1486, %v1810
    %v1875 = vmul.f32 %v1489, %v1811
    %v1876 = vld [vmem:[#allocation2] sm:$0xff]
    %v1877 = vadd.f32 %v1812, %v1813
    %v1878 = vadd.f32 %v1877, %v1814
    %v1879 = vadd.f32 %v1878, %v1815
    %v1880 = vadd.f32 %v1879, %v1816
    %v1881 = vadd.f32 %v1880, %v1817
    %v1882 = vadd.f32 %v1881, %v1818
    %v1883 = vadd.f32 %v1882, %v1819
    %v1884 = vrot.slane %v1883, 4
    %v1885 = vadd.f32 %v1883, %v1884
    %v1886 = vrot.slane %v1885, 2
    %v1887 = vadd.f32 %v1885, %v1886
    %v1888 = vrot.slane %v1887, 1
    %v1889 = vadd.f32 %v1887, %v1888
    %v1890 = vadd.f32 %v1820, %v1821
    %v1891 = vadd.f32 %v1890, %v1822
    %v1892 = vadd.f32 %v1891, %v1823
    %v1893 = vadd.f32 %v1892, %v1824
    %v1894 = vadd.f32 %v1893, %v1825
    %v1895 = vadd.f32 %v1894, %v1826
    %v1896 = vadd.f32 %v1895, %v1827
    %v1897 = vrot.slane %v1896, 4
    %v1898 = vadd.f32 %v1896, %v1897
    %v1899 = vrot.slane %v1898, 2
    %v1900 = vadd.f32 %v1898, %v1899
    %v1901 = vrot.slane %v1900, 1
    %v1902 = vadd.f32 %v1900, %v1901
    %v1903 = vadd.f32 %v1828, %v1829
    %v1904 = vadd.f32 %v1903, %v1830
    %v1905 = vadd.f32 %v1904, %v1831
    %v1906 = vadd.f32 %v1905, %v1832
    %v1907 = vadd.f32 %v1906, %v1833
    %v1908 = vadd.f32 %v1907, %v1834
    %v1909 = vadd.f32 %v1908, %v1835
    %v1910 = vrot.slane %v1909, 4
    %v1911 = vadd.f32 %v1909, %v1910
    %v1912 = vrot.slane %v1911, 2
    %v1913 = vadd.f32 %v1911, %v1912
    %v1914 = vrot.slane %v1913, 1
    %v1915 = vadd.f32 %v1913, %v1914
    %v1916 = vadd.f32 %v1836, %v1837
    %v1917 = vadd.f32 %v1916, %v1838
    %v1918 = vadd.f32 %v1917, %v1839
    %v1919 = vadd.f32 %v1918, %v1840
    %v1920 = vadd.f32 %v1919, %v1841
    %v1921 = vadd.f32 %v1920, %v1842
    %v1922 = vadd.f32 %v1921, %v1843
    %v1923 = vrot.slane %v1922, 4
    %v1924 = vadd.f32 %v1922, %v1923
    %v1925 = vrot.slane %v1924, 2
    %v1926 = vadd.f32 %v1924, %v1925
    %v1927 = vrot.slane %v1926, 1
    %v1928 = vadd.f32 %v1926, %v1927
    %v1929 = vadd.f32 %v1844, %v1845
    %v1930 = vadd.f32 %v1929, %v1846
    %v1931 = vadd.f32 %v1930, %v1847
    %v1932 = vadd.f32 %v1931, %v1848
    %v1933 = vadd.f32 %v1932, %v1849
    %v1934 = vadd.f32 %v1933, %v1850
    %v1935 = vadd.f32 %v1934, %v1851
    %v1936 = vrot.slane %v1935, 4
    %v1937 = vadd.f32 %v1935, %v1936
    %v1938 = vrot.slane %v1937, 2
    %v1939 = vadd.f32 %v1937, %v1938
    %v1940 = vrot.slane %v1939, 1
    %v1941 = vadd.f32 %v1939, %v1940
    %v1942 = vadd.f32 %v1852, %v1853
    %v1943 = vadd.f32 %v1942, %v1854
    %v1944 = vadd.f32 %v1943, %v1855
    %v1945 = vadd.f32 %v1944, %v1856
    %v1946 = vadd.f32 %v1945, %v1857
    %v1947 = vadd.f32 %v1946, %v1858
    %v1948 = vadd.f32 %v1947, %v1859
    %v1949 = vrot.slane %v1948, 4
    %v1950 = vadd.f32 %v1948, %v1949
    %v1951 = vrot.slane %v1950, 2
    %v1952 = vadd.f32 %v1950, %v1951
    %v1953 = vrot.slane %v1952, 1
    %v1954 = vadd.f32 %v1952, %v1953
    %v1955 = vadd.f32 %v1860, %v1861
    %v1956 = vadd.f32 %v1955, %v1862
    %v1957 = vadd.f32 %v1956, %v1863
    %v1958 = vadd.f32 %v1957, %v1864
    %v1959 = vadd.f32 %v1958, %v1865
    %v1960 = vadd.f32 %v1959, %v1866
    %v1961 = vadd.f32 %v1960, %v1867
    %v1962 = vrot.slane %v1961, 4
    %v1963 = vadd.f32 %v1961, %v1962
    %v1964 = vrot.slane %v1963, 2
    %v1965 = vadd.f32 %v1963, %v1964
    %v1966 = vrot.slane %v1965, 1
    %v1967 = vadd.f32 %v1965, %v1966
    %v1968 = vadd.f32 %v1868, %v1869
    %v1969 = vadd.f32 %v1968, %v1870
    %v1970 = vadd.f32 %v1969, %v1871
    %v1971 = vadd.f32 %v1970, %v1872
    %v1972 = vadd.f32 %v1971, %v1873
    %v1973 = vadd.f32 %v1972, %v1874
    %v1974 = vadd.f32 %v1973, %v1875
    %v1975 = vrot.slane %v1974, 4
    %v1976 = vadd.f32 %v1974, %v1975
    %v1977 = vrot.slane %v1976, 2
    %v1978 = vadd.f32 %v1976, %v1977
    %v1979 = vrot.slane %v1978, 1
    %v1980 = vadd.f32 %v1978, %v1979
    %vm1989 = vcmask 1041409
    %v1990 = vsel %vm1989, %v1902, %v1889
    %vm1991 = vcmask 1042434
    %v1992 = vsel %vm1991, %v1915, %v1990
    %vm1993 = vcmask 1043459
    %v1994 = vsel %vm1993, %v1928, %v1992
    %vm1995 = vcmask 1044484
    %v1996 = vsel %vm1995, %v1941, %v1994
    %vm1997 = vcmask 1045509
    %v1998 = vsel %vm1997, %v1954, %v1996
    %vm1999 = vcmask 1046534
    %v2000 = vsel %vm1999, %v1967, %v1998
    %vm2001 = vcmask 1047559
    %v2002 = vsel %vm2001, %v1980, %v2000
    %v2004 = vadd.f32 %v1876, %v2002
    %2005 = vst [vmem:[#allocation2] sm:$0xff] %v2004
    // Predicated region
    $region26: #{tpu_custom_call.1} parent=1 // pred_check
      %p2006 = pneg %p23
    $region27: #{tpu_custom_call.1} parent=1 // pred_check_branch
      %2008 = sbr.rel (%p2006) target = $region29
    $region28: #{tpu_custom_call.1} parent=1 // pred_region
      %v2009 = vld [vmem:[#allocation2] sm:$0xff]
      %v2010 = vmul.f32 %v2009, 0.015625
      %v2011 = vpack.c.bf16 %v2010, %v2010
      %2012 = vst [vmem:[#allocation3] sm:$0xf] %v2011
    $region29: #{tpu_custom_call.1} parent=1 // pred_fallthru
      _
    // Predicated region
    $region30: #{tpu_custom_call.1} parent=1 // pred_check
      _
    $region31: #{tpu_custom_call.1} parent=1 // pred_check_branch
      %2014 = sbr.rel (0) target = $region33
    $region32: #{tpu_custom_call.1} parent=1 // pred_region
      %s2016 = ssub.s32 64, 64
      %2017 = vsyncadd [#allocation4], %s2016
      %s2019 = sshll.u32 [#allocation3], 4
      %s2020 = int_to_ptr.vmem [resolvable:$true] %s2019
      %2022 = dma.vmem_to_hbm [thread:$0]  %s2020, 64, %s5, [#allocation4]
    $region33: #{tpu_custom_call.1} parent=1 // pred_fallthru
      _
    // Predicated region
    $region34: #{tpu_custom_call.1} parent=1 // pred_check
      _
    $region35: #{tpu_custom_call.1} parent=1 // pred_check_branch
      %2024 = sbr.rel (0) target = $region37
    $region36: #{tpu_custom_call.1} parent=1 // pred_region
      %2025 = dma.done [#allocation4], 64
    $region37: #{tpu_custom_call.1} parent=1 // pred_fallthru
      _
    %2026 = vsyncpa [#allocation4], 1

</llo_original>
